<compile_context>
chip_gen: v5e
topology: v5e:2x2
jax: 0.10.0
libtpu: 0.0.40
codegen_flags: <defaults>
</compile_context>

<pallas_src>
import functools

import jax
import jax.numpy as jnp
from jax import lax
from jax.experimental import pallas as pl
from jax.experimental.pallas import tpu as pltpu

NEG_SLOPE = 0.2  # negative_slope of the LeakyReLU in GATConv


# ---------------------------------------------------------------------------
# Fused Pallas kernel: the entire GAT forward in one invocation (grid=()).
# ---------------------------------------------------------------------------
def gat_fused_kernel(*refs, layer_cfgs):
    x_ref, bias_ref = refs[0], refs[1]
    param_refs = refs[2:-1]          # 3 refs per layer: W_all, AR, AL
    out_ref = refs[-1]

    bias = bias_ref[...].astype(jnp.float32)     # (N, N) additive mask (0 / -1e9)
    h = x_ref[...]                               # (N, F0)

    num_layers = len(layer_cfgs)
    for li, (num_heads, head_dim, apply_elu) in enumerate(layer_cfgs):
        w_all = param_refs[3 * li][...]          # (F_in, H*D)  heads stacked
        ar_mat = param_refs[3 * li + 1][...]     # (H*D, H)     block-diag attn_r
        al_mat = param_refs[3 * li + 2][...]     # (H, H*D)     block-diag attn_l

        # All heads in a single MXU matmul (lane-dense (N, H*D) result).
        z = jnp.dot(h, w_all, preferred_element_type=jnp.float32)         # (N, H*D)
        # Destination scores er[:, h] = <z_h, attn_r_h>, source scores
        # el[h, :] = <z_h, attn_l_h> -- two small stacked matmuls, no
        # per-head VPU reduce / 1-row MXU push.
        er = jnp.dot(z, ar_mat, preferred_element_type=jnp.float32)       # (N, H)
        el = lax.dot_general(al_mat, z, (((1,), (1,)), ((), ())),
                             preferred_element_type=jnp.float32)          # (H, N)

        head_outs = []
        for hh in range(num_heads):              # static, tiny head count
            # Edge logits e[i, j] = er_h[i] + el_h[j]  (edge j -> i).
            e = er[:, hh:hh + 1] + el[hh:hh + 1, :]                        # (N, N)
            e = jnp.where(e > 0, e, NEG_SLOPE * e)                         # LeakyReLU
            e = e + bias                                                   # -1e9 off-graph
            # Edge softmax over incoming edges (axis = src = 1).
            m = jnp.max(e, axis=1, keepdims=True)
            p = jnp.exp(e - m)               # masked entries underflow to exactly 0
            s = jnp.sum(p, axis=1, keepdims=True)
            # One reciprocal per row + broadcast multiply (not an (N,N) divide).
            # approx=True would push it to the EUP but perturbs results beyond
            # the 1e-4 reference check, so the exact reciprocal is kept.
            alpha = p * pl.reciprocal(s, approx=False)                     # (N, N)

            zh = z[:, hh * head_dim:(hh + 1) * head_dim]                   # (N, D)
            oh = jnp.dot(alpha, zh, preferred_element_type=jnp.float32)    # (N, D)
            if apply_elu:                                                  # ELU (hidden)
                oh = jnp.where(oh > 0, oh, jnp.exp(oh) - 1.0)
            head_outs.append(oh)

        if li < num_layers - 1:
            # torch .flatten(1): lane-dense (N, H*D), stays in VMEM.
            h = jnp.concatenate(head_outs, axis=-1)
        else:
            # torch .mean(1) over heads.
            acc = head_outs[0]
            for oh in head_outs[1:]:
                acc = acc + oh
            h = acc * (1.0 / num_heads)

    out_ref[...] = jnp.tanh(h)


# ---------------------------------------------------------------------------
# Parameter layout prep (layout plumbing only; could be hoisted/cached).
# ---------------------------------------------------------------------------
def _prep_layer_params(w, al, ar):
    """(H,F,D),(H,1,D),(H,1,D) -> W_all (F,H*D), AR (H*D,H), AL (H,H*D)."""
    h, f, d = w.shape
    w_all = jnp.transpose(w, (1, 0, 2)).reshape(f, h * d)
    eye = jnp.eye(h, dtype=w.dtype)
    # AR[h*D + k, g] = ar[h, 0, k] * (h == g)   -> er = z_all @ AR
    ar_mat = (ar[:, 0, :, None] * eye[:, None, :]).reshape(h * d, h)
    # AL[g, h*D + k] = al[h, 0, k] * (h == g)   -> el = AL @ z_all^T
    al_mat = (eye[:, :, None] * al[None, :, 0, :]).reshape(h, h * d)
    return w_all, ar_mat, al_mat


def gat_forward(x, params, adj):
    """Full fused GAT.forward.  Returns (N, num_classes)."""
    n = x.shape[0]
    # Additive softmax mask, shared by all layers, stored compactly in bf16.
    bias = jnp.where(adj > 0, 0.0, -1e9).astype(jnp.bfloat16)

    flat_inputs = [x, bias]
    layer_cfgs = []
    num_layers = len(params)
    for li, (w, al, ar) in enumerate(params):
        h, _, d = w.shape
        w_all, ar_mat, al_mat = _prep_layer_params(w, al, ar)
        flat_inputs += [w_all, ar_mat, al_mat]
        layer_cfgs.append((h, d, li < num_layers - 1))   # (heads, dim, apply_elu)

    num_classes = params[-1][0].shape[-1]
    kernel = functools.partial(gat_fused_kernel, layer_cfgs=tuple(layer_cfgs))
    vmem = pl.BlockSpec(memory_space=pltpu.MemorySpace.VMEM)

    # TODO(synk): for large N, tile over destination-row blocks
    # (grid=(N//TM,), flash-style streamed softmax over source blocks) and
    # re-derive TM for v7x's 64 MiB VMEM; at N=64 the whole working set is
    # far below VMEM on every generation, so a single whole-array block wins.
    # TODO(synk): matmul operands kept f32 (not bf16) so the in-script 1e-4
    # reference check stays tight; bf16 MXU inputs are the scaling option.
    return pl.pallas_call(
        kernel,
        out_shape=jax.ShapeDtypeStruct((n, num_classes), jnp.float32),
        in_specs=[vmem] * len(flat_inputs),
        out_specs=vmem,
    )(*flat_inputs)


# ---------------------------------------------------------------------------
# Pure-JAX reference (for correctness check only).
# ---------------------------------------------------------------------------
def _gat_layer_ref(x, w, al, ar, adj, apply_elu):
    z = jnp.einsum('nf,hfd->hnd', x, w)                    # (H, N, D)
    er = jnp.sum(z * ar, axis=-1)                          # (H, N)
    el = jnp.sum(z * al, axis=-1)                          # (H, N)
    e = er[:, :, None] + el[:, None, :]                    # (H, N, N)
    e = jnp.where(e > 0, e, NEG_SLOPE * e)
    e = jnp.where(adj[None] > 0, e, -1e9)
    e = e - jnp.max(e, axis=-1, keepdims=True)
    p = jnp.where(adj[None] > 0, jnp.exp(e), 0.0)
    alpha = p / jnp.sum(p, axis=-1, keepdims=True)
    out = jnp.einsum('hij,hjd->hid', alpha, z)
    if apply_elu:
        out = jnp.where(out > 0, out, jnp.exp(out) - 1.0)
    return out


def gat_forward_ref(x, params, adj):
    h = x
    for (w, al, ar) in params[:-1]:
        out = _gat_layer_ref(h, w, al, ar, adj, True)
        H, N, D = out.shape
        h = jnp.transpose(out, (1, 0, 2)).reshape(N, H * D)
    w, al, ar = params[-1]
    out = _gat_layer_ref(h, w, al, ar, adj, False)
    return jnp.tanh(jnp.mean(out, axis=0))


# ---------------------------------------------------------------------------
if __name__ == "__main__":
    key = jax.random.PRNGKey(0)

    # Small, forward-consistent hyperparameters.
    N = 64            # number of graph nodes
    in_dim = 16
    num_hidden = 32
    num_classes = 8
    num_layers = 2
    heads = [2, 2, 1]  # hidden-layer head counts + output head count
    # TODO(synk): residual=False chosen as the constructor hyperparameter; the
    # DGL residual branch (extra linear) is not exercised here.

    k_x, k_adj, k_p = jax.random.split(key, 3)
    x = jax.random.normal(k_x, (N, in_dim), jnp.float32)

    # Deterministic random graph with self-loops (adj[dst, src]).
    adj = (jax.random.uniform(k_adj, (N, N)) < 0.15).astype(jnp.float32)
    adj = jnp.maximum(adj, jnp.eye(N, dtype=jnp.float32))

    # Layer dims exactly as GAT.__init__ builds them.
    layer_dims = [(in_dim, num_hidden, heads[0])]
    for l in range(1, num_layers):
        layer_dims.append((num_hidden * heads[l - 1], num_hidden, heads[l]))
    layer_dims.append((num_hidden * heads[-2], num_classes, heads[-1]))

    # Deterministic parameter init.
    params = []
    for (fin, fout, H) in layer_dims:
        kw, kl, kr, k_p = jax.random.split(k_p, 4)
        scale = 1.0 / jnp.sqrt(jnp.float32(fin))
        w = jax.random.normal(kw, (H, fin, fout), jnp.float32) * scale
        al = jax.random.normal(kl, (H, 1, fout), jnp.float32) * 0.1
        ar = jax.random.normal(kr, (H, 1, fout), jnp.float32) * 0.1
        params.append((w, al, ar))

    out = gat_forward(x, params, adj)
    out = jax.block_until_ready(out)

    ref = gat_forward_ref(x, params, adj)
    assert out.shape == (N, num_classes), out.shape
    max_err = float(jnp.max(jnp.abs(out - ref)))
    assert jnp.allclose(out, ref, atol=1e-4, rtol=1e-4), max_err

    print("KERNEL_OK")
</pallas_src>

<mosaic_0001>
module attributes {stable_mosaic.version = 11 : i64} {
  func.func @gat_fused_kernel(%arg0: memref<64x16xf32, #tpu.memory_space<vmem>>, %arg1: memref<64x64xbf16, #tpu.memory_space<vmem>>, %arg2: memref<16x64xf32, #tpu.memory_space<vmem>>, %arg3: memref<64x2xf32, #tpu.memory_space<vmem>>, %arg4: memref<2x64xf32, #tpu.memory_space<vmem>>, %arg5: memref<64x64xf32, #tpu.memory_space<vmem>>, %arg6: memref<64x2xf32, #tpu.memory_space<vmem>>, %arg7: memref<2x64xf32, #tpu.memory_space<vmem>>, %arg8: memref<64x8xf32, #tpu.memory_space<vmem>>, %arg9: memref<8x1xf32, #tpu.memory_space<vmem>>, %arg10: memref<1x8xf32, #tpu.memory_space<vmem>>, %arg11: memref<64x8xf32, #tpu.memory_space<vmem>>) attributes {dimension_semantics = [], scalar_prefetch = 0 : i64, scratch_operands = 0 : i64, tpu.core_type = #tpu.core_type<tc>} {
    %c0 = arith.constant 0 : index
    %c0_0 = arith.constant 0 : index
    %0 = vector.load %arg1[%c0, %c0_0] : memref<64x64xbf16, #tpu.memory_space<vmem>>, vector<64x64xbf16>
    %1 = arith.extf %0 : vector<64x64xbf16> to vector<64x64xf32>
    %c0_1 = arith.constant 0 : index
    %c0_2 = arith.constant 0 : index
    %2 = vector.load %arg0[%c0_1, %c0_2] : memref<64x16xf32, #tpu.memory_space<vmem>>, vector<64x16xf32>
    %c0_3 = arith.constant 0 : index
    %c0_4 = arith.constant 0 : index
    %3 = vector.load %arg2[%c0_3, %c0_4] : memref<16x64xf32, #tpu.memory_space<vmem>>, vector<16x64xf32>
    %c0_5 = arith.constant 0 : index
    %c0_6 = arith.constant 0 : index
    %4 = vector.load %arg3[%c0_5, %c0_6] : memref<64x2xf32, #tpu.memory_space<vmem>>, vector<64x2xf32>
    %c0_7 = arith.constant 0 : index
    %c0_8 = arith.constant 0 : index
    %5 = vector.load %arg4[%c0_7, %c0_8] : memref<2x64xf32, #tpu.memory_space<vmem>>, vector<2x64xf32>
    %cst = arith.constant dense<0.000000e+00> : vector<64x64xf32>
    %6 = tpu.matmul %2, %3, %cst {dimension_numbers = #tpu.dot_dimension_numbers<[1], [0], [0], [1], [0, 0, 1, 1], [], []>} : vector<64x16xf32>, vector<16x64xf32>, vector<64x64xf32> -> vector<64x64xf32>
    %cst_9 = arith.constant dense<0.000000e+00> : vector<64x2xf32>
    %7 = tpu.matmul %6, %4, %cst_9 {dimension_numbers = #tpu.dot_dimension_numbers<[1], [0], [0], [1], [0, 0, 1, 1], [], []>} : vector<64x64xf32>, vector<64x2xf32>, vector<64x2xf32> -> vector<64x2xf32>
    %cst_10 = arith.constant dense<0.000000e+00> : vector<2x64xf32>
    %8 = tpu.matmul %5, %6, %cst_10 {dimension_numbers = #tpu.dot_dimension_numbers<[1], [1], [0], [0], [0, 0, 1, 0], [], []>} : vector<2x64xf32>, vector<64x64xf32>, vector<2x64xf32> -> vector<2x64xf32>
    %9 = vector.extract_strided_slice %7 {offsets = [0, 0], sizes = [64, 1], strides = [1, 1]} : vector<64x2xf32> to vector<64x1xf32>
    %10 = vector.extract_strided_slice %8 {offsets = [0, 0], sizes = [1, 64], strides = [1, 1]} : vector<2x64xf32> to vector<1x64xf32>
    %11 = vector.broadcast %9 : vector<64x1xf32> to vector<64x64xf32>
    %12 = vector.broadcast %10 : vector<1x64xf32> to vector<64x64xf32>
    %13 = arith.addf %11, %12 : vector<64x64xf32>
    %cst_11 = arith.constant 0.000000e+00 : f32
    %14 = vector.broadcast %cst_11 : f32 to vector<64x64xf32>
    %15 = arith.cmpf ogt, %13, %14 : vector<64x64xf32>
    %cst_12 = arith.constant 2.000000e-01 : f32
    %16 = vector.broadcast %cst_12 : f32 to vector<64x64xf32>
    %17 = arith.mulf %16, %13 : vector<64x64xf32>
    %18 = arith.select %15, %13, %17 : vector<64x64xi1>, vector<64x64xf32>
    %19 = arith.addf %18, %1 : vector<64x64xf32>
    %cst_13 = arith.constant dense<0xFF800000> : vector<64xf32>
    %20 = vector.multi_reduction <maximumf>, %19, %cst_13 [1] : vector<64x64xf32> to vector<64xf32>
    %21 = vector.shape_cast %20 : vector<64xf32> to vector<64x1xf32>
    %22 = vector.broadcast %21 : vector<64x1xf32> to vector<64x64xf32>
    %23 = arith.subf %19, %22 : vector<64x64xf32>
    %24 = math.exp %23 : vector<64x64xf32>
    %cst_14 = arith.constant dense<0.000000e+00> : vector<64xf32>
    %25 = vector.multi_reduction <add>, %24, %cst_14 [1] : vector<64x64xf32> to vector<64xf32>
    %26 = vector.shape_cast %25 : vector<64xf32> to vector<64x1xf32>
    %27 = tpu.reciprocal %26 : vector<64x1xf32> -> vector<64x1xf32>
    %28 = vector.broadcast %27 : vector<64x1xf32> to vector<64x64xf32>
    %29 = arith.mulf %24, %28 : vector<64x64xf32>
    %30 = vector.extract_strided_slice %6 {offsets = [0, 0], sizes = [64, 32], strides = [1, 1]} : vector<64x64xf32> to vector<64x32xf32>
    %cst_15 = arith.constant dense<0.000000e+00> : vector<64x32xf32>
    %31 = tpu.matmul %29, %30, %cst_15 {dimension_numbers = #tpu.dot_dimension_numbers<[1], [0], [0], [1], [0, 0, 1, 1], [], []>} : vector<64x64xf32>, vector<64x32xf32>, vector<64x32xf32> -> vector<64x32xf32>
    %cst_16 = arith.constant 0.000000e+00 : f32
    %32 = vector.broadcast %cst_16 : f32 to vector<64x32xf32>
    %33 = arith.cmpf ogt, %31, %32 : vector<64x32xf32>
    %34 = math.exp %31 : vector<64x32xf32>
    %cst_17 = arith.constant 1.000000e+00 : f32
    %35 = vector.broadcast %cst_17 : f32 to vector<64x32xf32>
    %36 = arith.subf %34, %35 : vector<64x32xf32>
    %37 = arith.select %33, %31, %36 : vector<64x32xi1>, vector<64x32xf32>
    %38 = vector.extract_strided_slice %7 {offsets = [0, 1], sizes = [64, 1], strides = [1, 1]} : vector<64x2xf32> to vector<64x1xf32>
    %39 = vector.extract_strided_slice %8 {offsets = [1, 0], sizes = [1, 64], strides = [1, 1]} : vector<2x64xf32> to vector<1x64xf32>
    %40 = vector.broadcast %38 : vector<64x1xf32> to vector<64x64xf32>
    %41 = vector.broadcast %39 : vector<1x64xf32> to vector<64x64xf32>
    %42 = arith.addf %40, %41 : vector<64x64xf32>
    %cst_18 = arith.constant 0.000000e+00 : f32
    %43 = vector.broadcast %cst_18 : f32 to vector<64x64xf32>
    %44 = arith.cmpf ogt, %42, %43 : vector<64x64xf32>
    %cst_19 = arith.constant 2.000000e-01 : f32
    %45 = vector.broadcast %cst_19 : f32 to vector<64x64xf32>
    %46 = arith.mulf %45, %42 : vector<64x64xf32>
    %47 = arith.select %44, %42, %46 : vector<64x64xi1>, vector<64x64xf32>
    %48 = arith.addf %47, %1 : vector<64x64xf32>
    %cst_20 = arith.constant dense<0xFF800000> : vector<64xf32>
    %49 = vector.multi_reduction <maximumf>, %48, %cst_20 [1] : vector<64x64xf32> to vector<64xf32>
    %50 = vector.shape_cast %49 : vector<64xf32> to vector<64x1xf32>
    %51 = vector.broadcast %50 : vector<64x1xf32> to vector<64x64xf32>
    %52 = arith.subf %48, %51 : vector<64x64xf32>
    %53 = math.exp %52 : vector<64x64xf32>
    %cst_21 = arith.constant dense<0.000000e+00> : vector<64xf32>
    %54 = vector.multi_reduction <add>, %53, %cst_21 [1] : vector<64x64xf32> to vector<64xf32>
    %55 = vector.shape_cast %54 : vector<64xf32> to vector<64x1xf32>
    %56 = tpu.reciprocal %55 : vector<64x1xf32> -> vector<64x1xf32>
    %57 = vector.broadcast %56 : vector<64x1xf32> to vector<64x64xf32>
    %58 = arith.mulf %53, %57 : vector<64x64xf32>
    %59 = vector.extract_strided_slice %6 {offsets = [0, 32], sizes = [64, 32], strides = [1, 1]} : vector<64x64xf32> to vector<64x32xf32>
    %cst_22 = arith.constant dense<0.000000e+00> : vector<64x32xf32>
    %60 = tpu.matmul %58, %59, %cst_22 {dimension_numbers = #tpu.dot_dimension_numbers<[1], [0], [0], [1], [0, 0, 1, 1], [], []>} : vector<64x64xf32>, vector<64x32xf32>, vector<64x32xf32> -> vector<64x32xf32>
    %cst_23 = arith.constant 0.000000e+00 : f32
    %61 = vector.broadcast %cst_23 : f32 to vector<64x32xf32>
    %62 = arith.cmpf ogt, %60, %61 : vector<64x32xf32>
    %63 = math.exp %60 : vector<64x32xf32>
    %cst_24 = arith.constant 1.000000e+00 : f32
    %64 = vector.broadcast %cst_24 : f32 to vector<64x32xf32>
    %65 = arith.subf %63, %64 : vector<64x32xf32>
    %66 = arith.select %62, %60, %65 : vector<64x32xi1>, vector<64x32xf32>
    %67 = tpu.concatenate %37, %66 in 1 : vector<64x32xf32>, vector<64x32xf32> -> vector<64x64xf32>
    %c0_25 = arith.constant 0 : index
    %c0_26 = arith.constant 0 : index
    %68 = vector.load %arg5[%c0_25, %c0_26] : memref<64x64xf32, #tpu.memory_space<vmem>>, vector<64x64xf32>
    %c0_27 = arith.constant 0 : index
    %c0_28 = arith.constant 0 : index
    %69 = vector.load %arg6[%c0_27, %c0_28] : memref<64x2xf32, #tpu.memory_space<vmem>>, vector<64x2xf32>
    %c0_29 = arith.constant 0 : index
    %c0_30 = arith.constant 0 : index
    %70 = vector.load %arg7[%c0_29, %c0_30] : memref<2x64xf32, #tpu.memory_space<vmem>>, vector<2x64xf32>
    %cst_31 = arith.constant dense<0.000000e+00> : vector<64x64xf32>
    %71 = tpu.matmul %67, %68, %cst_31 {dimension_numbers = #tpu.dot_dimension_numbers<[1], [0], [0], [1], [0, 0, 1, 1], [], []>} : vector<64x64xf32>, vector<64x64xf32>, vector<64x64xf32> -> vector<64x64xf32>
    %cst_32 = arith.constant dense<0.000000e+00> : vector<64x2xf32>
    %72 = tpu.matmul %71, %69, %cst_32 {dimension_numbers = #tpu.dot_dimension_numbers<[1], [0], [0], [1], [0, 0, 1, 1], [], []>} : vector<64x64xf32>, vector<64x2xf32>, vector<64x2xf32> -> vector<64x2xf32>
    %cst_33 = arith.constant dense<0.000000e+00> : vector<2x64xf32>
    %73 = tpu.matmul %70, %71, %cst_33 {dimension_numbers = #tpu.dot_dimension_numbers<[1], [1], [0], [0], [0, 0, 1, 0], [], []>} : vector<2x64xf32>, vector<64x64xf32>, vector<2x64xf32> -> vector<2x64xf32>
    %74 = vector.extract_strided_slice %72 {offsets = [0, 0], sizes = [64, 1], strides = [1, 1]} : vector<64x2xf32> to vector<64x1xf32>
    %75 = vector.extract_strided_slice %73 {offsets = [0, 0], sizes = [1, 64], strides = [1, 1]} : vector<2x64xf32> to vector<1x64xf32>
    %76 = vector.broadcast %74 : vector<64x1xf32> to vector<64x64xf32>
    %77 = vector.broadcast %75 : vector<1x64xf32> to vector<64x64xf32>
    %78 = arith.addf %76, %77 : vector<64x64xf32>
    %cst_34 = arith.constant 0.000000e+00 : f32
    %79 = vector.broadcast %cst_34 : f32 to vector<64x64xf32>
    %80 = arith.cmpf ogt, %78, %79 : vector<64x64xf32>
    %cst_35 = arith.constant 2.000000e-01 : f32
    %81 = vector.broadcast %cst_35 : f32 to vector<64x64xf32>
    %82 = arith.mulf %81, %78 : vector<64x64xf32>
    %83 = arith.select %80, %78, %82 : vector<64x64xi1>, vector<64x64xf32>
    %84 = arith.addf %83, %1 : vector<64x64xf32>
    %cst_36 = arith.constant dense<0xFF800000> : vector<64xf32>
    %85 = vector.multi_reduction <maximumf>, %84, %cst_36 [1] : vector<64x64xf32> to vector<64xf32>
    %86 = vector.shape_cast %85 : vector<64xf32> to vector<64x1xf32>
    %87 = vector.broadcast %86 : vector<64x1xf32> to vector<64x64xf32>
    %88 = arith.subf %84, %87 : vector<64x64xf32>
    %89 = math.exp %88 : vector<64x64xf32>
    %cst_37 = arith.constant dense<0.000000e+00> : vector<64xf32>
    %90 = vector.multi_reduction <add>, %89, %cst_37 [1] : vector<64x64xf32> to vector<64xf32>
    %91 = vector.shape_cast %90 : vector<64xf32> to vector<64x1xf32>
    %92 = tpu.reciprocal %91 : vector<64x1xf32> -> vector<64x1xf32>
    %93 = vector.broadcast %92 : vector<64x1xf32> to vector<64x64xf32>
    %94 = arith.mulf %89, %93 : vector<64x64xf32>
    %95 = vector.extract_strided_slice %71 {offsets = [0, 0], sizes = [64, 32], strides = [1, 1]} : vector<64x64xf32> to vector<64x32xf32>
    %cst_38 = arith.constant dense<0.000000e+00> : vector<64x32xf32>
    %96 = tpu.matmul %94, %95, %cst_38 {dimension_numbers = #tpu.dot_dimension_numbers<[1], [0], [0], [1], [0, 0, 1, 1], [], []>} : vector<64x64xf32>, vector<64x32xf32>, vector<64x32xf32> -> vector<64x32xf32>
    %cst_39 = arith.constant 0.000000e+00 : f32
    %97 = vector.broadcast %cst_39 : f32 to vector<64x32xf32>
    %98 = arith.cmpf ogt, %96, %97 : vector<64x32xf32>
    %99 = math.exp %96 : vector<64x32xf32>
    %cst_40 = arith.constant 1.000000e+00 : f32
    %100 = vector.broadcast %cst_40 : f32 to vector<64x32xf32>
    %101 = arith.subf %99, %100 : vector<64x32xf32>
    %102 = arith.select %98, %96, %101 : vector<64x32xi1>, vector<64x32xf32>
    %103 = vector.extract_strided_slice %72 {offsets = [0, 1], sizes = [64, 1], strides = [1, 1]} : vector<64x2xf32> to vector<64x1xf32>
    %104 = vector.extract_strided_slice %73 {offsets = [1, 0], sizes = [1, 64], strides = [1, 1]} : vector<2x64xf32> to vector<1x64xf32>
    %105 = vector.broadcast %103 : vector<64x1xf32> to vector<64x64xf32>
    %106 = vector.broadcast %104 : vector<1x64xf32> to vector<64x64xf32>
    %107 = arith.addf %105, %106 : vector<64x64xf32>
    %cst_41 = arith.constant 0.000000e+00 : f32
    %108 = vector.broadcast %cst_41 : f32 to vector<64x64xf32>
    %109 = arith.cmpf ogt, %107, %108 : vector<64x64xf32>
    %cst_42 = arith.constant 2.000000e-01 : f32
    %110 = vector.broadcast %cst_42 : f32 to vector<64x64xf32>
    %111 = arith.mulf %110, %107 : vector<64x64xf32>
    %112 = arith.select %109, %107, %111 : vector<64x64xi1>, vector<64x64xf32>
    %113 = arith.addf %112, %1 : vector<64x64xf32>
    %cst_43 = arith.constant dense<0xFF800000> : vector<64xf32>
    %114 = vector.multi_reduction <maximumf>, %113, %cst_43 [1] : vector<64x64xf32> to vector<64xf32>
    %115 = vector.shape_cast %114 : vector<64xf32> to vector<64x1xf32>
    %116 = vector.broadcast %115 : vector<64x1xf32> to vector<64x64xf32>
    %117 = arith.subf %113, %116 : vector<64x64xf32>
    %118 = math.exp %117 : vector<64x64xf32>
    %cst_44 = arith.constant dense<0.000000e+00> : vector<64xf32>
    %119 = vector.multi_reduction <add>, %118, %cst_44 [1] : vector<64x64xf32> to vector<64xf32>
    %120 = vector.shape_cast %119 : vector<64xf32> to vector<64x1xf32>
    %121 = tpu.reciprocal %120 : vector<64x1xf32> -> vector<64x1xf32>
    %122 = vector.broadcast %121 : vector<64x1xf32> to vector<64x64xf32>
    %123 = arith.mulf %118, %122 : vector<64x64xf32>
    %124 = vector.extract_strided_slice %71 {offsets = [0, 32], sizes = [64, 32], strides = [1, 1]} : vector<64x64xf32> to vector<64x32xf32>
    %cst_45 = arith.constant dense<0.000000e+00> : vector<64x32xf32>
    %125 = tpu.matmul %123, %124, %cst_45 {dimension_numbers = #tpu.dot_dimension_numbers<[1], [0], [0], [1], [0, 0, 1, 1], [], []>} : vector<64x64xf32>, vector<64x32xf32>, vector<64x32xf32> -> vector<64x32xf32>
    %cst_46 = arith.constant 0.000000e+00 : f32
    %126 = vector.broadcast %cst_46 : f32 to vector<64x32xf32>
    %127 = arith.cmpf ogt, %125, %126 : vector<64x32xf32>
    %128 = math.exp %125 : vector<64x32xf32>
    %cst_47 = arith.constant 1.000000e+00 : f32
    %129 = vector.broadcast %cst_47 : f32 to vector<64x32xf32>
    %130 = arith.subf %128, %129 : vector<64x32xf32>
    %131 = arith.select %127, %125, %130 : vector<64x32xi1>, vector<64x32xf32>
    %132 = tpu.concatenate %102, %131 in 1 : vector<64x32xf32>, vector<64x32xf32> -> vector<64x64xf32>
    %c0_48 = arith.constant 0 : index
    %c0_49 = arith.constant 0 : index
    %133 = vector.load %arg8[%c0_48, %c0_49] : memref<64x8xf32, #tpu.memory_space<vmem>>, vector<64x8xf32>
    %c0_50 = arith.constant 0 : index
    %c0_51 = arith.constant 0 : index
    %134 = vector.load %arg9[%c0_50, %c0_51] : memref<8x1xf32, #tpu.memory_space<vmem>>, vector<8x1xf32>
    %c0_52 = arith.constant 0 : index
    %c0_53 = arith.constant 0 : index
    %135 = vector.load %arg10[%c0_52, %c0_53] : memref<1x8xf32, #tpu.memory_space<vmem>>, vector<1x8xf32>
    %cst_54 = arith.constant dense<0.000000e+00> : vector<64x8xf32>
    %136 = tpu.matmul %132, %133, %cst_54 {dimension_numbers = #tpu.dot_dimension_numbers<[1], [0], [0], [1], [0, 0, 1, 1], [], []>} : vector<64x64xf32>, vector<64x8xf32>, vector<64x8xf32> -> vector<64x8xf32>
    %cst_55 = arith.constant dense<0.000000e+00> : vector<64x1xf32>
    %137 = tpu.matmul %136, %134, %cst_55 {dimension_numbers = #tpu.dot_dimension_numbers<[1], [0], [0], [1], [0, 0, 1, 1], [], []>} : vector<64x8xf32>, vector<8x1xf32>, vector<64x1xf32> -> vector<64x1xf32>
    %cst_56 = arith.constant dense<0.000000e+00> : vector<1x64xf32>
    %138 = tpu.matmul %135, %136, %cst_56 {dimension_numbers = #tpu.dot_dimension_numbers<[1], [1], [0], [0], [0, 0, 1, 0], [], []>} : vector<1x8xf32>, vector<64x8xf32>, vector<1x64xf32> -> vector<1x64xf32>
    %139 = vector.broadcast %137 : vector<64x1xf32> to vector<64x64xf32>
    %140 = vector.broadcast %138 : vector<1x64xf32> to vector<64x64xf32>
    %141 = arith.addf %139, %140 : vector<64x64xf32>
    %cst_57 = arith.constant 0.000000e+00 : f32
    %142 = vector.broadcast %cst_57 : f32 to vector<64x64xf32>
    %143 = arith.cmpf ogt, %141, %142 : vector<64x64xf32>
    %cst_58 = arith.constant 2.000000e-01 : f32
    %144 = vector.broadcast %cst_58 : f32 to vector<64x64xf32>
    %145 = arith.mulf %144, %141 : vector<64x64xf32>
    %146 = arith.select %143, %141, %145 : vector<64x64xi1>, vector<64x64xf32>
    %147 = arith.addf %146, %1 : vector<64x64xf32>
    %cst_59 = arith.constant dense<0xFF800000> : vector<64xf32>
    %148 = vector.multi_reduction <maximumf>, %147, %cst_59 [1] : vector<64x64xf32> to vector<64xf32>
    %149 = vector.shape_cast %148 : vector<64xf32> to vector<64x1xf32>
    %150 = vector.broadcast %149 : vector<64x1xf32> to vector<64x64xf32>
    %151 = arith.subf %147, %150 : vector<64x64xf32>
    %152 = math.exp %151 : vector<64x64xf32>
    %cst_60 = arith.constant dense<0.000000e+00> : vector<64xf32>
    %153 = vector.multi_reduction <add>, %152, %cst_60 [1] : vector<64x64xf32> to vector<64xf32>
    %154 = vector.shape_cast %153 : vector<64xf32> to vector<64x1xf32>
    %155 = tpu.reciprocal %154 : vector<64x1xf32> -> vector<64x1xf32>
    %156 = vector.broadcast %155 : vector<64x1xf32> to vector<64x64xf32>
    %157 = arith.mulf %152, %156 : vector<64x64xf32>
    %cst_61 = arith.constant dense<0.000000e+00> : vector<64x8xf32>
    %158 = tpu.matmul %157, %136, %cst_61 {dimension_numbers = #tpu.dot_dimension_numbers<[1], [0], [0], [1], [0, 0, 1, 1], [], []>} : vector<64x64xf32>, vector<64x8xf32>, vector<64x8xf32> -> vector<64x8xf32>
    %cst_62 = arith.constant 1.000000e+00 : f32
    %159 = vector.broadcast %cst_62 : f32 to vector<64x8xf32>
    %160 = arith.mulf %158, %159 : vector<64x8xf32>
    %161 = math.tanh %160 : vector<64x8xf32>
    %c0_63 = arith.constant 0 : index
    %c0_64 = arith.constant 0 : index
    %162 = vector.load %arg11[%c0_63, %c0_64] : memref<64x8xf32, #tpu.memory_space<vmem>>, vector<64x8xf32>
    tpu.vector_store %arg11[%c0_63, %c0_64], %161 {strides = array<i32>} : memref<64x8xf32, #tpu.memory_space<vmem>>, vector<64x8xf32>,
    return
  }
}

</mosaic_0001>

<llo_original>
// kernel: tpu_custom_call.1
$region0: #{tpu_custom_call.1}
  #allocation0 [shape = 'u32[]', space=smem, size = 0x4, offset = 0x4, fixed_abs, tag = 'smem constant byte address 0x4 - core index']
  #allocation1 [shape = 'u32[72,128]{1,0:T(1,128)}', space=vmem, size = 0x9000, scoped, tag = 'internal scratch']
  %s0 = inlined_call_operand.vmem [shape: f32[64,16], index: 0, kind: input, shape index: {}]
  %s1 = inlined_call_operand.vmem [shape: bf16[64,64], index: 1, kind: input, shape index: {}]
  %s2 = inlined_call_operand.vmem [shape: f32[16,64], index: 2, kind: input, shape index: {}]
  %s3 = inlined_call_operand.vmem [shape: f32[64,2], index: 3, kind: input, shape index: {}]
  %s4 = inlined_call_operand.vmem [shape: f32[2,64], index: 4, kind: input, shape index: {}]
  %s5 = inlined_call_operand.vmem [shape: f32[64,64], index: 5, kind: input, shape index: {}]
  %s6 = inlined_call_operand.vmem [shape: f32[64,2], index: 6, kind: input, shape index: {}]
  %s7 = inlined_call_operand.vmem [shape: f32[2,64], index: 7, kind: input, shape index: {}]
  %s8 = inlined_call_operand.vmem [shape: f32[64,8], index: 8, kind: input, shape index: {}]
  %s9 = inlined_call_operand.vmem [shape: f32[8,1], index: 9, kind: input, shape index: {}]
  %s10 = inlined_call_operand.vmem [shape: f32[1,8], index: 10, kind: input, shape index: {}]
  %s11 = inlined_call_operand.vmem [shape: f32[64,8], index: 11, kind: output, shape index: {}]
  %s12 = sld [smem:[#allocation0]]
  $region54: #{tpu_custom_call.1} parent=0
    _
  %s14 = ssub.s32 1, %s12
  %s15 = scalar_select 0, %s14, %s12
  // Predicated region
  $region2: #{tpu_custom_call.1} parent=0 // pred_check
    _
  $region3: #{tpu_custom_call.1} parent=0 // pred_check_branch
    %17 = sbr.rel (0) target = $region5
  $region4: #{tpu_custom_call.1} parent=0 // pred_region
    _
  $region5: #{tpu_custom_call.1} parent=0 // pred_fallthru
    _
  // Predicated region
  $region6: #{tpu_custom_call.1} parent=0 // pred_check
    _
  $region7: #{tpu_custom_call.1} parent=0 // pred_check_branch
    %19 = sbr.rel (0) target = $region9
  $region8: #{tpu_custom_call.1} parent=0 // pred_region
    _
  $region9: #{tpu_custom_call.1} parent=0 // pred_fallthru
    _
  // Predicated region
  $region10: #{tpu_custom_call.1} parent=0 // pred_check
    _
  $region11: #{tpu_custom_call.1} parent=0 // pred_check_branch
    %21 = sbr.rel (0) target = $region13
  $region12: #{tpu_custom_call.1} parent=0 // pred_region
    _
  $region13: #{tpu_custom_call.1} parent=0 // pred_fallthru
    _
  // Predicated region
  $region14: #{tpu_custom_call.1} parent=0 // pred_check
    _
  $region15: #{tpu_custom_call.1} parent=0 // pred_check_branch
    %23 = sbr.rel (0) target = $region17
  $region16: #{tpu_custom_call.1} parent=0 // pred_region
    _
  $region17: #{tpu_custom_call.1} parent=0 // pred_fallthru
    _
  // Predicated region
  $region18: #{tpu_custom_call.1} parent=0 // pred_check
    _
  $region19: #{tpu_custom_call.1} parent=0 // pred_check_branch
    %25 = sbr.rel (0) target = $region21
  $region20: #{tpu_custom_call.1} parent=0 // pred_region
    _
  $region21: #{tpu_custom_call.1} parent=0 // pred_fallthru
    _
  // Predicated region
  $region22: #{tpu_custom_call.1} parent=0 // pred_check
    _
  $region23: #{tpu_custom_call.1} parent=0 // pred_check_branch
    %27 = sbr.rel (0) target = $region25
  $region24: #{tpu_custom_call.1} parent=0 // pred_region
    _
  $region25: #{tpu_custom_call.1} parent=0 // pred_fallthru
    _
  // Predicated region
  $region26: #{tpu_custom_call.1} parent=0 // pred_check
    _
  $region27: #{tpu_custom_call.1} parent=0 // pred_check_branch
    %29 = sbr.rel (0) target = $region29
  $region28: #{tpu_custom_call.1} parent=0 // pred_region
    _
  $region29: #{tpu_custom_call.1} parent=0 // pred_fallthru
    _
  // Predicated region
  $region30: #{tpu_custom_call.1} parent=0 // pred_check
    _
  $region31: #{tpu_custom_call.1} parent=0 // pred_check_branch
    %31 = sbr.rel (0) target = $region33
  $region32: #{tpu_custom_call.1} parent=0 // pred_region
    _
  $region33: #{tpu_custom_call.1} parent=0 // pred_fallthru
    _
  // Predicated region
  $region34: #{tpu_custom_call.1} parent=0 // pred_check
    _
  $region35: #{tpu_custom_call.1} parent=0 // pred_check_branch
    %33 = sbr.rel (0) target = $region37
  $region36: #{tpu_custom_call.1} parent=0 // pred_region
    _
  $region37: #{tpu_custom_call.1} parent=0 // pred_fallthru
    _
  // Predicated region
  $region38: #{tpu_custom_call.1} parent=0 // pred_check
    _
  $region39: #{tpu_custom_call.1} parent=0 // pred_check_branch
    %35 = sbr.rel (0) target = $region41
  $region40: #{tpu_custom_call.1} parent=0 // pred_region
    _
  $region41: #{tpu_custom_call.1} parent=0 // pred_fallthru
    _
  // Predicated region
  $region42: #{tpu_custom_call.1} parent=0 // pred_check
    _
  $region43: #{tpu_custom_call.1} parent=0 // pred_check_branch
    %37 = sbr.rel (0) target = $region45
  $region44: #{tpu_custom_call.1} parent=0 // pred_region
    _
  $region45: #{tpu_custom_call.1} parent=0 // pred_fallthru
    _
  %v38 = vld [vmem:[%s1] sm:$0xf]
  %v39 = vld [vmem:[%s1 + $0x4] sm:$0xf]
  %v40 = vld [vmem:[%s1 + $0x8] sm:$0xf]
  %v41 = vld [vmem:[%s1 + $0xc] sm:$0xf]
  %v42 = vld [vmem:[%s1 + $0x10] sm:$0xf]
  %v43 = vld [vmem:[%s1 + $0x14] sm:$0xf]
  %v44 = vld [vmem:[%s1 + $0x18] sm:$0xf]
  %v45 = vld [vmem:[%s1 + $0x1c] sm:$0xf]
  %v46 = vunpack.c.l.bf16 %v38
  %v47 = vunpack.c.l.bf16 %v39
  %v48 = vunpack.c.l.bf16 %v40
  %v49 = vunpack.c.l.bf16 %v41
  %v50 = vunpack.c.l.bf16 %v42
  %v51 = vunpack.c.l.bf16 %v43
  %v52 = vunpack.c.l.bf16 %v44
  %v53 = vunpack.c.l.bf16 %v45
  %v54 = vld [vmem:[%s0] sm:$0xff]
  %v55 = vld [vmem:[%s0 + $0x8] sm:$0xff]
  %v56 = vld [vmem:[%s0 + $0x10] sm:$0xff]
  %v57 = vld [vmem:[%s0 + $0x18] sm:$0xff]
  %v58 = vld [vmem:[%s0 + $0x20] sm:$0xff]
  %v59 = vld [vmem:[%s0 + $0x28] sm:$0xff]
  %v60 = vld [vmem:[%s0 + $0x30] sm:$0xff]
  %v61 = vld [vmem:[%s0 + $0x38] sm:$0xff]
  %v62 = vld [vmem:[%s2] sm:$0xff]
  %v63 = vld [vmem:[%s2 + $0x8] sm:$0xff]
  %v64 = vld [vmem:[%s3] sm:$0xff]
  %v65 = vld [vmem:[%s3 + $0x8] sm:$0xff]
  %v66 = vld [vmem:[%s3 + $0x10] sm:$0xff]
  %v67 = vld [vmem:[%s3 + $0x18] sm:$0xff]
  %v68 = vld [vmem:[%s3 + $0x20] sm:$0xff]
  %v69 = vld [vmem:[%s3 + $0x28] sm:$0xff]
  %v70 = vld [vmem:[%s3 + $0x30] sm:$0xff]
  %v71 = vld [vmem:[%s3 + $0x38] sm:$0xff]
  %v72 = vld [vmem:[%s4] sm:$0x3]
  %vm73 = vcmask 130048
  %v75 = vsel %vm73, %v54, 0
  %v78 = vsel %vm73, %v55, 0
  %v81 = vsel %vm73, %v56, 0
  %v84 = vsel %vm73, %v57, 0
  %v87 = vsel %vm73, %v58, 0
  %v90 = vsel %vm73, %v59, 0
  %v93 = vsel %vm73, %v60, 0
  %v96 = vsel %vm73, %v61, 0
  %98 = vmatpush.msra.mxu0 0.0
  %99 = vmatpush.msra.mxu0 0.0
  %100 = vmatpush.msra.mxu0 0.0
  %101 = vmatpush.msra.mxu0 0.0
  %102 = vmatpush.msra.mxu0 0.0
  %103 = vmatpush.msra.mxu0 0.0
  %104 = vmatpush.msra.mxu0 0.0
  %105 = vmatpush.msra.mxu0 0.0
  %106 = vmatpush.msra.mxu0 0.0
  %107 = vmatpush.msra.mxu0 0.0
  %108 = vmatpush.msra.mxu0 0.0
  %109 = vmatpush.msra.mxu0 0.0
  %110 = vmatpush.msra.mxu0 0.0
  %111 = vmatpush.msra.mxu0 0.0
  %112 = vmatpush.msra.mxu0 %v63
  %113 = vmatpush.msra.mxu0 %v62
  %114 = vmatmul.f32.gmra.mxu0 %v75
  %v115 = vpop.f32.mrf.mxu0
  %v116 = vadd.f32 0.0, %v115
  %117 = vmatmul.f32.gmra.mxu0 %v78
  %v118 = vpop.f32.mrf.mxu0
  %v119 = vadd.f32 0.0, %v118
  %120 = vmatmul.f32.gmra.mxu0 %v81
  %v121 = vpop.f32.mrf.mxu0
  %v122 = vadd.f32 0.0, %v121
  %123 = vmatmul.f32.gmra.mxu0 %v84
  %v124 = vpop.f32.mrf.mxu0
  %v125 = vadd.f32 0.0, %v124
  %126 = vmatmul.f32.gmra.mxu0 %v87
  %v127 = vpop.f32.mrf.mxu0
  %v128 = vadd.f32 0.0, %v127
  %129 = vmatmul.f32.gmra.mxu0 %v90
  %v130 = vpop.f32.mrf.mxu0
  %v131 = vadd.f32 0.0, %v130
  %132 = vmatmul.f32.gmra.mxu0 %v93
  %v133 = vpop.f32.mrf.mxu0
  %v134 = vadd.f32 0.0, %v133
  %135 = vmatmul.f32.gmra.mxu0 %v96
  %v136 = vpop.f32.mrf.mxu0
  %v137 = vadd.f32 0.0, %v136
  %138 = vdwg.mxu0
  %vm139 = vcmask 523264
  %v141 = vsel %vm139, %v116, 0
  %v144 = vsel %vm139, %v119, 0
  %v147 = vsel %vm139, %v122, 0
  %v150 = vsel %vm139, %v125, 0
  %v153 = vsel %vm139, %v128, 0
  %v156 = vsel %vm139, %v131, 0
  %v159 = vsel %vm139, %v134, 0
  %v162 = vsel %vm139, %v137, 0
  %164 = vmatpush.msra.mxu0 0.0
  %165 = vmatpush.msra.mxu0 0.0
  %166 = vmatpush.msra.mxu0 0.0
  %167 = vmatpush.msra.mxu0 0.0
  %168 = vmatpush.msra.mxu0 0.0
  %169 = vmatpush.msra.mxu0 0.0
  %170 = vmatpush.msra.mxu0 0.0
  %171 = vmatpush.msra.mxu0 0.0
  %172 = vmatpush.msra.mxu0 %v71
  %173 = vmatpush.msra.mxu0 %v70
  %174 = vmatpush.msra.mxu0 %v69
  %175 = vmatpush.msra.mxu0 %v68
  %176 = vmatpush.msra.mxu0 %v67
  %177 = vmatpush.msra.mxu0 %v66
  %178 = vmatpush.msra.mxu0 %v65
  %179 = vmatpush.msra.mxu0 %v64
  %180 = vmatmul.f32.gmra.mxu0 %v141
  %v181 = vpop.f32.mrf.mxu0
  %v182 = vadd.f32 0.0, %v181
  %183 = vmatmul.f32.gmra.mxu0 %v144
  %v184 = vpop.f32.mrf.mxu0
  %v185 = vadd.f32 0.0, %v184
  %186 = vmatmul.f32.gmra.mxu0 %v147
  %v187 = vpop.f32.mrf.mxu0
  %v188 = vadd.f32 0.0, %v187
  %189 = vmatmul.f32.gmra.mxu0 %v150
  %v190 = vpop.f32.mrf.mxu0
  %v191 = vadd.f32 0.0, %v190
  %192 = vmatmul.f32.gmra.mxu0 %v153
  %v193 = vpop.f32.mrf.mxu0
  %v194 = vadd.f32 0.0, %v193
  %195 = vmatmul.f32.gmra.mxu0 %v156
  %v196 = vpop.f32.mrf.mxu0
  %v197 = vadd.f32 0.0, %v196
  %198 = vmatmul.f32.gmra.mxu0 %v159
  %v199 = vpop.f32.mrf.mxu0
  %v200 = vadd.f32 0.0, %v199
  %201 = vmatmul.f32.gmra.mxu0 %v162
  %v202 = vpop.f32.mrf.mxu0
  %v203 = vadd.f32 0.0, %v202
  %204 = vdwg.mxu0
  %v206 = vsel %vm139, %v72, 0
  %208 = vmatpush.xpose.msra.mxu0 0.0
  %209 = vmatpush.xpose.msra.mxu0 0.0
  %210 = vmatpush.xpose.msra.mxu0 0.0
  %211 = vmatpush.xpose.msra.mxu0 0.0
  %212 = vmatpush.xpose.msra.mxu0 0.0
  %213 = vmatpush.xpose.msra.mxu0 0.0
  %214 = vmatpush.xpose.msra.mxu0 0.0
  %215 = vmatpush.xpose.msra.mxu0 0.0
  %216 = vmatpush.xpose.msra.mxu0 %v162
  %217 = vmatpush.xpose.msra.mxu0 %v159
  %218 = vmatpush.xpose.msra.mxu0 %v156
  %219 = vmatpush.xpose.msra.mxu0 %v153
  %220 = vmatpush.xpose.msra.mxu0 %v150
  %221 = vmatpush.xpose.msra.mxu0 %v147
  %222 = vmatpush.xpose.msra.mxu0 %v144
  %223 = vmatpush.xpose.msra.mxu0 %v141
  %224 = vmatmul.f32.gmra.mxu0 %v206
  %v225 = vpop.f32.mrf.mxu0
  %v226 = vadd.f32 0.0, %v225
  %227 = vdwg.mxu0
  %229 = vset.pattern.permute.xlu0 0
  %230 = vperm.xlu0 %229, %v182
  %v231 = vpop.permute.xlu0 %230
  %234 = vset.pattern.permute.xlu0 0
  %235 = vperm.xlu0 %234, %v185
  %v236 = vpop.permute.xlu0 %235
  %239 = vset.pattern.permute.xlu0 0
  %240 = vperm.xlu0 %239, %v188
  %v241 = vpop.permute.xlu0 %240
  %244 = vset.pattern.permute.xlu0 0
  %245 = vperm.xlu0 %244, %v191
  %v246 = vpop.permute.xlu0 %245
  %249 = vset.pattern.permute.xlu0 0
  %250 = vperm.xlu0 %249, %v194
  %v251 = vpop.permute.xlu0 %250
  %254 = vset.pattern.permute.xlu0 0
  %255 = vperm.xlu0 %254, %v197
  %v256 = vpop.permute.xlu0 %255
  %259 = vset.pattern.permute.xlu0 0
  %260 = vperm.xlu0 %259, %v200
  %v261 = vpop.permute.xlu0 %260
  %264 = vset.pattern.permute.xlu0 0
  %265 = vperm.xlu0 %264, %v203
  %v266 = vpop.permute.xlu0 %265
  %v268 = vperm.slane %v226, 0
  %v269 = vadd.f32 %v231, %v268
  %v270 = vadd.f32 %v236, %v268
  %v271 = vadd.f32 %v241, %v268
  %v272 = vadd.f32 %v246, %v268
  %v273 = vadd.f32 %v251, %v268
  %v274 = vadd.f32 %v256, %v268
  %v275 = vadd.f32 %v261, %v268
  %v276 = vadd.f32 %v266, %v268
  %vm277 = vcmp.gt.f32.partialorder %v269, 0.0
  %vm278 = vcmp.gt.f32.partialorder %v270, 0.0
  %vm279 = vcmp.gt.f32.partialorder %v271, 0.0
  %vm280 = vcmp.gt.f32.partialorder %v272, 0.0
  %vm281 = vcmp.gt.f32.partialorder %v273, 0.0
  %vm282 = vcmp.gt.f32.partialorder %v274, 0.0
  %vm283 = vcmp.gt.f32.partialorder %v275, 0.0
  %vm284 = vcmp.gt.f32.partialorder %v276, 0.0
  %v285 = vmul.f32 %v269, 0.2
  %v286 = vmul.f32 %v270, 0.2
  %v287 = vmul.f32 %v271, 0.2
  %v288 = vmul.f32 %v272, 0.2
  %v289 = vmul.f32 %v273, 0.2
  %v290 = vmul.f32 %v274, 0.2
  %v291 = vmul.f32 %v275, 0.2
  %v292 = vmul.f32 %v276, 0.2
  %v293 = vsel %vm277, %v269, %v285
  %v294 = vsel %vm278, %v270, %v286
  %v295 = vsel %vm279, %v271, %v287
  %v296 = vsel %vm280, %v272, %v288
  %v297 = vsel %vm281, %v273, %v289
  %v298 = vsel %vm282, %v274, %v290
  %v299 = vsel %vm283, %v275, %v291
  %v300 = vsel %vm284, %v276, %v292
  %v301 = vadd.f32 %v293, %v46
  %v302 = vadd.f32 %v294, %v47
  %v303 = vadd.f32 %v295, %v48
  %v304 = vadd.f32 %v296, %v49
  %v305 = vadd.f32 %v297, %v50
  %v306 = vadd.f32 %v298, %v51
  %v307 = vadd.f32 %v299, %v52
  %v308 = vadd.f32 %v300, %v53
  %v309 = vsel %vm139, %v301, -inf
  %310 = vmax.xlane.f32.xlu0 %v309
  %v311 = vpop.xlane.xlu0 %310
  %v312 = vsel %vm139, %v302, -inf
  %313 = vmax.xlane.f32.xlu0 %v312
  %v314 = vpop.xlane.xlu0 %313
  %v315 = vsel %vm139, %v303, -inf
  %316 = vmax.xlane.f32.xlu0 %v315
  %v317 = vpop.xlane.xlu0 %316
  %v318 = vsel %vm139, %v304, -inf
  %319 = vmax.xlane.f32.xlu0 %v318
  %v320 = vpop.xlane.xlu0 %319
  %v321 = vsel %vm139, %v305, -inf
  %322 = vmax.xlane.f32.xlu0 %v321
  %v323 = vpop.xlane.xlu0 %322
  %v324 = vsel %vm139, %v306, -inf
  %325 = vmax.xlane.f32.xlu0 %v324
  %v326 = vpop.xlane.xlu0 %325
  %v327 = vsel %vm139, %v307, -inf
  %328 = vmax.xlane.f32.xlu0 %v327
  %v329 = vpop.xlane.xlu0 %328
  %v330 = vsel %vm139, %v308, -inf
  %331 = vmax.xlane.f32.xlu0 %v330
  %v332 = vpop.xlane.xlu0 %331
  %v333 = vsub.f32 %v301, %v311
  %v334 = vsub.f32 %v302, %v314
  %v335 = vsub.f32 %v303, %v317
  %v336 = vsub.f32 %v304, %v320
  %v337 = vsub.f32 %v305, %v323
  %v338 = vsub.f32 %v306, %v326
  %v339 = vsub.f32 %v307, %v329
  %v340 = vsub.f32 %v308, %v332
  %v341 = vmul.f32 %v333, 1.442695
  %v342 = vpow.pop %v341
  %v343 = vmul.f32 %v334, 1.442695
  %v344 = vpow.pop %v343
  %v345 = vmul.f32 %v335, 1.442695
  %v346 = vpow.pop %v345
  %v347 = vmul.f32 %v336, 1.442695
  %v348 = vpow.pop %v347
  %v349 = vmul.f32 %v337, 1.442695
  %v350 = vpow.pop %v349
  %v351 = vmul.f32 %v338, 1.442695
  %v352 = vpow.pop %v351
  %v353 = vmul.f32 %v339, 1.442695
  %v354 = vpow.pop %v353
  %v355 = vmul.f32 %v340, 1.442695
  %v356 = vpow.pop %v355
  %v357 = vsel %vm139, %v342, 0.0
  %358 = vadd.xlane.f32.xlu0 %v357
  %v359 = vpop.xlane.xlu0 %358
  %v360 = vsel %vm139, %v344, 0.0
  %361 = vadd.xlane.f32.xlu0 %v360
  %v362 = vpop.xlane.xlu0 %361
  %v363 = vsel %vm139, %v346, 0.0
  %364 = vadd.xlane.f32.xlu0 %v363
  %v365 = vpop.xlane.xlu0 %364
  %v366 = vsel %vm139, %v348, 0.0
  %367 = vadd.xlane.f32.xlu0 %v366
  %v368 = vpop.xlane.xlu0 %367
  %v369 = vsel %vm139, %v350, 0.0
  %370 = vadd.xlane.f32.xlu0 %v369
  %v371 = vpop.xlane.xlu0 %370
  %v372 = vsel %vm139, %v352, 0.0
  %373 = vadd.xlane.f32.xlu0 %v372
  %v374 = vpop.xlane.xlu0 %373
  %v375 = vsel %vm139, %v354, 0.0
  %376 = vadd.xlane.f32.xlu0 %v375
  %v377 = vpop.xlane.xlu0 %376
  %v378 = vsel %vm139, %v356, 0.0
  %379 = vadd.xlane.f32.xlu0 %v378
  %v380 = vpop.xlane.xlu0 %379
  %v381 = vrcp.pop %v359
  %v382 = vmul.f32 %v359, %v381
  %v383 = vsub.f32 1.0, %v382
  %v384 = vmul.f32 %v381, %v383
  %v385 = vadd.f32 %v381, %v384
  %vm386 = vweird.f32 %v359
  %vm387 = vweird.f32 %v381
  %vm388 = vmor %vm386, %vm387
  %v389 = vsel %vm388, %v381, %v385
  %v390 = vand.u32 2147483647, %v359
  %vm391 = vcmp.eq.f32.partialorder %v390, 8.507059e+37
  %v392 = vand.u32 %v359, 2147483648
  %v393 = vor.u32 1.1754944e-38, %v392
  %v394 = vsel %vm391, %v393, %v389
  %v395 = vrcp.pop %v362
  %v396 = vmul.f32 %v362, %v395
  %v397 = vsub.f32 1.0, %v396
  %v398 = vmul.f32 %v395, %v397
  %v399 = vadd.f32 %v395, %v398
  %vm400 = vweird.f32 %v362
  %vm401 = vweird.f32 %v395
  %vm402 = vmor %vm400, %vm401
  %v403 = vsel %vm402, %v395, %v399
  %v404 = vand.u32 2147483647, %v362
  %vm405 = vcmp.eq.f32.partialorder %v404, 8.507059e+37
  %v406 = vand.u32 %v362, 2147483648
  %v407 = vor.u32 1.1754944e-38, %v406
  %v408 = vsel %vm405, %v407, %v403
  %v409 = vrcp.pop %v365
  %v410 = vmul.f32 %v365, %v409
  %v411 = vsub.f32 1.0, %v410
  %v412 = vmul.f32 %v409, %v411
  %v413 = vadd.f32 %v409, %v412
  %vm414 = vweird.f32 %v365
  %vm415 = vweird.f32 %v409
  %vm416 = vmor %vm414, %vm415
  %v417 = vsel %vm416, %v409, %v413
  %v418 = vand.u32 2147483647, %v365
  %vm419 = vcmp.eq.f32.partialorder %v418, 8.507059e+37
  %v420 = vand.u32 %v365, 2147483648
  %v421 = vor.u32 1.1754944e-38, %v420
  %v422 = vsel %vm419, %v421, %v417
  %v423 = vrcp.pop %v368
  %v424 = vmul.f32 %v368, %v423
  %v425 = vsub.f32 1.0, %v424
  %v426 = vmul.f32 %v423, %v425
  %v427 = vadd.f32 %v423, %v426
  %vm428 = vweird.f32 %v368
  %vm429 = vweird.f32 %v423
  %vm430 = vmor %vm428, %vm429
  %v431 = vsel %vm430, %v423, %v427
  %v432 = vand.u32 2147483647, %v368
  %vm433 = vcmp.eq.f32.partialorder %v432, 8.507059e+37
  %v434 = vand.u32 %v368, 2147483648
  %v435 = vor.u32 1.1754944e-38, %v434
  %v436 = vsel %vm433, %v435, %v431
  %v437 = vrcp.pop %v371
  %v438 = vmul.f32 %v371, %v437
  %v439 = vsub.f32 1.0, %v438
  %v440 = vmul.f32 %v437, %v439
  %v441 = vadd.f32 %v437, %v440
  %vm442 = vweird.f32 %v371
  %vm443 = vweird.f32 %v437
  %vm444 = vmor %vm442, %vm443
  %v445 = vsel %vm444, %v437, %v441
  %v446 = vand.u32 2147483647, %v371
  %vm447 = vcmp.eq.f32.partialorder %v446, 8.507059e+37
  %v448 = vand.u32 %v371, 2147483648
  %v449 = vor.u32 1.1754944e-38, %v448
  %v450 = vsel %vm447, %v449, %v445
  %v451 = vrcp.pop %v374
  %v452 = vmul.f32 %v374, %v451
  %v453 = vsub.f32 1.0, %v452
  %v454 = vmul.f32 %v451, %v453
  %v455 = vadd.f32 %v451, %v454
  %vm456 = vweird.f32 %v374
  %vm457 = vweird.f32 %v451
  %vm458 = vmor %vm456, %vm457
  %v459 = vsel %vm458, %v451, %v455
  %v460 = vand.u32 2147483647, %v374
  %vm461 = vcmp.eq.f32.partialorder %v460, 8.507059e+37
  %v462 = vand.u32 %v374, 2147483648
  %v463 = vor.u32 1.1754944e-38, %v462
  %v464 = vsel %vm461, %v463, %v459
  %v465 = vrcp.pop %v377
  %v466 = vmul.f32 %v377, %v465
  %v467 = vsub.f32 1.0, %v466
  %v468 = vmul.f32 %v465, %v467
  %v469 = vadd.f32 %v465, %v468
  %vm470 = vweird.f32 %v377
  %vm471 = vweird.f32 %v465
  %vm472 = vmor %vm470, %vm471
  %v473 = vsel %vm472, %v465, %v469
  %v474 = vand.u32 2147483647, %v377
  %vm475 = vcmp.eq.f32.partialorder %v474, 8.507059e+37
  %v476 = vand.u32 %v377, 2147483648
  %v477 = vor.u32 1.1754944e-38, %v476
  %v478 = vsel %vm475, %v477, %v473
  %v479 = vrcp.pop %v380
  %v480 = vmul.f32 %v380, %v479
  %v481 = vsub.f32 1.0, %v480
  %v482 = vmul.f32 %v479, %v481
  %v483 = vadd.f32 %v479, %v482
  %vm484 = vweird.f32 %v380
  %vm485 = vweird.f32 %v479
  %vm486 = vmor %vm484, %vm485
  %v487 = vsel %vm486, %v479, %v483
  %v488 = vand.u32 2147483647, %v380
  %vm489 = vcmp.eq.f32.partialorder %v488, 8.507059e+37
  %v490 = vand.u32 %v380, 2147483648
  %v491 = vor.u32 1.1754944e-38, %v490
  %v492 = vsel %vm489, %v491, %v487
  %v493 = vmul.f32 %v342, %v394
  %v494 = vmul.f32 %v344, %v408
  %v495 = vmul.f32 %v346, %v422
  %v496 = vmul.f32 %v348, %v436
  %v497 = vmul.f32 %v350, %v450
  %v498 = vmul.f32 %v352, %v464
  %v499 = vmul.f32 %v354, %v478
  %v500 = vmul.f32 %v356, %v492
  %v502 = vsel %vm139, %v493, 0
  %v505 = vsel %vm139, %v494, 0
  %v508 = vsel %vm139, %v495, 0
  %v511 = vsel %vm139, %v496, 0
  %v514 = vsel %vm139, %v497, 0
  %v517 = vsel %vm139, %v498, 0
  %v520 = vsel %vm139, %v499, 0
  %v523 = vsel %vm139, %v500, 0
  %525 = vmatpush.msra.mxu0 0.0
  %526 = vmatpush.msra.mxu0 0.0
  %527 = vmatpush.msra.mxu0 0.0
  %528 = vmatpush.msra.mxu0 0.0
  %529 = vmatpush.msra.mxu0 0.0
  %530 = vmatpush.msra.mxu0 0.0
  %531 = vmatpush.msra.mxu0 0.0
  %532 = vmatpush.msra.mxu0 0.0
  %533 = vmatpush.msra.mxu0 %v137
  %534 = vmatpush.msra.mxu0 %v134
  %535 = vmatpush.msra.mxu0 %v131
  %536 = vmatpush.msra.mxu0 %v128
  %537 = vmatpush.msra.mxu0 %v125
  %538 = vmatpush.msra.mxu0 %v122
  %539 = vmatpush.msra.mxu0 %v119
  %540 = vmatpush.msra.mxu0 %v116
  %541 = vmatmul.f32.gmra.mxu0 %v502
  %v542 = vpop.f32.mrf.mxu0
  %v543 = vadd.f32 0.0, %v542
  %544 = vmatmul.f32.gmra.mxu0 %v505
  %v545 = vpop.f32.mrf.mxu0
  %v546 = vadd.f32 0.0, %v545
  %547 = vmatmul.f32.gmra.mxu0 %v508
  %v548 = vpop.f32.mrf.mxu0
  %v549 = vadd.f32 0.0, %v548
  %550 = vmatmul.f32.gmra.mxu0 %v511
  %v551 = vpop.f32.mrf.mxu0
  %v552 = vadd.f32 0.0, %v551
  %553 = vmatmul.f32.gmra.mxu0 %v514
  %v554 = vpop.f32.mrf.mxu0
  %v555 = vadd.f32 0.0, %v554
  %556 = vmatmul.f32.gmra.mxu0 %v517
  %v557 = vpop.f32.mrf.mxu0
  %v558 = vadd.f32 0.0, %v557
  %559 = vmatmul.f32.gmra.mxu0 %v520
  %v560 = vpop.f32.mrf.mxu0
  %v561 = vadd.f32 0.0, %v560
  %562 = vmatmul.f32.gmra.mxu0 %v523
  %v563 = vpop.f32.mrf.mxu0
  %v564 = vadd.f32 0.0, %v563
  %565 = vdwg.mxu0
  %vm566 = vcmp.gt.f32.partialorder %v543, 0.0
  %vm567 = vcmp.gt.f32.partialorder %v546, 0.0
  %vm568 = vcmp.gt.f32.partialorder %v549, 0.0
  %vm569 = vcmp.gt.f32.partialorder %v552, 0.0
  %vm570 = vcmp.gt.f32.partialorder %v555, 0.0
  %vm571 = vcmp.gt.f32.partialorder %v558, 0.0
  %vm572 = vcmp.gt.f32.partialorder %v561, 0.0
  %vm573 = vcmp.gt.f32.partialorder %v564, 0.0
  %v574 = vmul.f32 %v543, 1.442695
  %v575 = vpow.pop %v574
  %v576 = vmul.f32 %v546, 1.442695
  %v577 = vpow.pop %v576
  %v578 = vmul.f32 %v549, 1.442695
  %v579 = vpow.pop %v578
  %v580 = vmul.f32 %v552, 1.442695
  %v581 = vpow.pop %v580
  %v582 = vmul.f32 %v555, 1.442695
  %v583 = vpow.pop %v582
  %v584 = vmul.f32 %v558, 1.442695
  %v585 = vpow.pop %v584
  %v586 = vmul.f32 %v561, 1.442695
  %v587 = vpow.pop %v586
  %v588 = vmul.f32 %v564, 1.442695
  %v589 = vpow.pop %v588
  %v590 = vsub.f32 %v575, 1.0
  %v591 = vsub.f32 %v577, 1.0
  %v592 = vsub.f32 %v579, 1.0
  %v593 = vsub.f32 %v581, 1.0
  %v594 = vsub.f32 %v583, 1.0
  %v595 = vsub.f32 %v585, 1.0
  %v596 = vsub.f32 %v587, 1.0
  %v597 = vsub.f32 %v589, 1.0
  %v598 = vsel %vm566, %v543, %v590
  %v599 = vsel %vm567, %v546, %v591
  %v600 = vsel %vm568, %v549, %v592
  %v601 = vsel %vm569, %v552, %v593
  %v602 = vsel %vm570, %v555, %v594
  %v603 = vsel %vm571, %v558, %v595
  %v604 = vsel %vm572, %v561, %v596
  %v605 = vsel %vm573, %v564, %v597
  %606 = vset.pattern.permute.xlu0 1
  %607 = vperm.xlu0 %606, %v182
  %v608 = vpop.permute.xlu0 %607
  %610 = vset.pattern.permute.xlu0 1
  %611 = vperm.xlu0 %610, %v185
  %v612 = vpop.permute.xlu0 %611
  %614 = vset.pattern.permute.xlu0 1
  %615 = vperm.xlu0 %614, %v188
  %v616 = vpop.permute.xlu0 %615
  %618 = vset.pattern.permute.xlu0 1
  %619 = vperm.xlu0 %618, %v191
  %v620 = vpop.permute.xlu0 %619
  %622 = vset.pattern.permute.xlu0 1
  %623 = vperm.xlu0 %622, %v194
  %v624 = vpop.permute.xlu0 %623
  %626 = vset.pattern.permute.xlu0 1
  %627 = vperm.xlu0 %626, %v197
  %v628 = vpop.permute.xlu0 %627
  %630 = vset.pattern.permute.xlu0 1
  %631 = vperm.xlu0 %630, %v200
  %v632 = vpop.permute.xlu0 %631
  %634 = vset.pattern.permute.xlu0 1
  %635 = vperm.xlu0 %634, %v203
  %v636 = vpop.permute.xlu0 %635
  %v638 = vperm.slane %v226, 1
  %v639 = vadd.f32 %v608, %v638
  %v640 = vadd.f32 %v612, %v638
  %v641 = vadd.f32 %v616, %v638
  %v642 = vadd.f32 %v620, %v638
  %v643 = vadd.f32 %v624, %v638
  %v644 = vadd.f32 %v628, %v638
  %v645 = vadd.f32 %v632, %v638
  %v646 = vadd.f32 %v636, %v638
  %vm647 = vcmp.gt.f32.partialorder %v639, 0.0
  %vm648 = vcmp.gt.f32.partialorder %v640, 0.0
  %vm649 = vcmp.gt.f32.partialorder %v641, 0.0
  %vm650 = vcmp.gt.f32.partialorder %v642, 0.0
  %vm651 = vcmp.gt.f32.partialorder %v643, 0.0
  %vm652 = vcmp.gt.f32.partialorder %v644, 0.0
  %vm653 = vcmp.gt.f32.partialorder %v645, 0.0
  %vm654 = vcmp.gt.f32.partialorder %v646, 0.0
  %v655 = vmul.f32 %v639, 0.2
  %v656 = vmul.f32 %v640, 0.2
  %v657 = vmul.f32 %v641, 0.2
  %v658 = vmul.f32 %v642, 0.2
  %v659 = vmul.f32 %v643, 0.2
  %v660 = vmul.f32 %v644, 0.2
  %v661 = vmul.f32 %v645, 0.2
  %v662 = vmul.f32 %v646, 0.2
  %v663 = vsel %vm647, %v639, %v655
  %v664 = vsel %vm648, %v640, %v656
  %v665 = vsel %vm649, %v641, %v657
  %v666 = vsel %vm650, %v642, %v658
  %v667 = vsel %vm651, %v643, %v659
  %v668 = vsel %vm652, %v644, %v660
  %v669 = vsel %vm653, %v645, %v661
  %v670 = vsel %vm654, %v646, %v662
  %v671 = vadd.f32 %v663, %v46
  %v672 = vadd.f32 %v664, %v47
  %v673 = vadd.f32 %v665, %v48
  %v674 = vadd.f32 %v666, %v49
  %v675 = vadd.f32 %v667, %v50
  %v676 = vadd.f32 %v668, %v51
  %v677 = vadd.f32 %v669, %v52
  %v678 = vadd.f32 %v670, %v53
  %v679 = vsel %vm139, %v671, -inf
  %680 = vmax.xlane.f32.xlu0 %v679
  %v681 = vpop.xlane.xlu0 %680
  %v682 = vsel %vm139, %v672, -inf
  %683 = vmax.xlane.f32.xlu0 %v682
  %v684 = vpop.xlane.xlu0 %683
  %v685 = vsel %vm139, %v673, -inf
  %686 = vmax.xlane.f32.xlu0 %v685
  %v687 = vpop.xlane.xlu0 %686
  %v688 = vsel %vm139, %v674, -inf
  %689 = vmax.xlane.f32.xlu0 %v688
  %v690 = vpop.xlane.xlu0 %689
  %v691 = vsel %vm139, %v675, -inf
  %692 = vmax.xlane.f32.xlu0 %v691
  %v693 = vpop.xlane.xlu0 %692
  %v694 = vsel %vm139, %v676, -inf
  %695 = vmax.xlane.f32.xlu0 %v694
  %v696 = vpop.xlane.xlu0 %695
  %v697 = vsel %vm139, %v677, -inf
  %698 = vmax.xlane.f32.xlu0 %v697
  %v699 = vpop.xlane.xlu0 %698
  %v700 = vsel %vm139, %v678, -inf
  %701 = vmax.xlane.f32.xlu0 %v700
  %v702 = vpop.xlane.xlu0 %701
  %v703 = vsub.f32 %v671, %v681
  %v704 = vsub.f32 %v672, %v684
  %v705 = vsub.f32 %v673, %v687
  %v706 = vsub.f32 %v674, %v690
  %v707 = vsub.f32 %v675, %v693
  %v708 = vsub.f32 %v676, %v696
  %v709 = vsub.f32 %v677, %v699
  %v710 = vsub.f32 %v678, %v702
  %v711 = vmul.f32 %v703, 1.442695
  %v712 = vpow.pop %v711
  %v713 = vmul.f32 %v704, 1.442695
  %v714 = vpow.pop %v713
  %v715 = vmul.f32 %v705, 1.442695
  %v716 = vpow.pop %v715
  %v717 = vmul.f32 %v706, 1.442695
  %v718 = vpow.pop %v717
  %v719 = vmul.f32 %v707, 1.442695
  %v720 = vpow.pop %v719
  %v721 = vmul.f32 %v708, 1.442695
  %v722 = vpow.pop %v721
  %v723 = vmul.f32 %v709, 1.442695
  %v724 = vpow.pop %v723
  %v725 = vmul.f32 %v710, 1.442695
  %v726 = vpow.pop %v725
  %v727 = vsel %vm139, %v712, 0.0
  %728 = vadd.xlane.f32.xlu0 %v727
  %v729 = vpop.xlane.xlu0 %728
  %v730 = vsel %vm139, %v714, 0.0
  %731 = vadd.xlane.f32.xlu0 %v730
  %v732 = vpop.xlane.xlu0 %731
  %v733 = vsel %vm139, %v716, 0.0
  %734 = vadd.xlane.f32.xlu0 %v733
  %v735 = vpop.xlane.xlu0 %734
  %v736 = vsel %vm139, %v718, 0.0
  %737 = vadd.xlane.f32.xlu0 %v736
  %v738 = vpop.xlane.xlu0 %737
  %v739 = vsel %vm139, %v720, 0.0
  %740 = vadd.xlane.f32.xlu0 %v739
  %v741 = vpop.xlane.xlu0 %740
  %v742 = vsel %vm139, %v722, 0.0
  %743 = vadd.xlane.f32.xlu0 %v742
  %v744 = vpop.xlane.xlu0 %743
  %v745 = vsel %vm139, %v724, 0.0
  %746 = vadd.xlane.f32.xlu0 %v745
  %v747 = vpop.xlane.xlu0 %746
  %v748 = vsel %vm139, %v726, 0.0
  %749 = vadd.xlane.f32.xlu0 %v748
  %v750 = vpop.xlane.xlu0 %749
  %v751 = vrcp.pop %v729
  %v752 = vmul.f32 %v729, %v751
  %v753 = vsub.f32 1.0, %v752
  %v754 = vmul.f32 %v751, %v753
  %v755 = vadd.f32 %v751, %v754
  %vm756 = vweird.f32 %v729
  %vm757 = vweird.f32 %v751
  %vm758 = vmor %vm756, %vm757
  %v759 = vsel %vm758, %v751, %v755
  %v760 = vand.u32 2147483647, %v729
  %vm761 = vcmp.eq.f32.partialorder %v760, 8.507059e+37
  %v762 = vand.u32 %v729, 2147483648
  %v763 = vor.u32 1.1754944e-38, %v762
  %v764 = vsel %vm761, %v763, %v759
  %v765 = vrcp.pop %v732
  %v766 = vmul.f32 %v732, %v765
  %v767 = vsub.f32 1.0, %v766
  %v768 = vmul.f32 %v765, %v767
  %v769 = vadd.f32 %v765, %v768
  %vm770 = vweird.f32 %v732
  %vm771 = vweird.f32 %v765
  %vm772 = vmor %vm770, %vm771
  %v773 = vsel %vm772, %v765, %v769
  %v774 = vand.u32 2147483647, %v732
  %vm775 = vcmp.eq.f32.partialorder %v774, 8.507059e+37
  %v776 = vand.u32 %v732, 2147483648
  %v777 = vor.u32 1.1754944e-38, %v776
  %v778 = vsel %vm775, %v777, %v773
  %v779 = vrcp.pop %v735
  %v780 = vmul.f32 %v735, %v779
  %v781 = vsub.f32 1.0, %v780
  %v782 = vmul.f32 %v779, %v781
  %v783 = vadd.f32 %v779, %v782
  %vm784 = vweird.f32 %v735
  %vm785 = vweird.f32 %v779
  %vm786 = vmor %vm784, %vm785
  %v787 = vsel %vm786, %v779, %v783
  %v788 = vand.u32 2147483647, %v735
  %vm789 = vcmp.eq.f32.partialorder %v788, 8.507059e+37
  %v790 = vand.u32 %v735, 2147483648
  %v791 = vor.u32 1.1754944e-38, %v790
  %v792 = vsel %vm789, %v791, %v787
  %v793 = vrcp.pop %v738
  %v794 = vmul.f32 %v738, %v793
  %v795 = vsub.f32 1.0, %v794
  %v796 = vmul.f32 %v793, %v795
  %v797 = vadd.f32 %v793, %v796
  %vm798 = vweird.f32 %v738
  %vm799 = vweird.f32 %v793
  %vm800 = vmor %vm798, %vm799
  %v801 = vsel %vm800, %v793, %v797
  %v802 = vand.u32 2147483647, %v738
  %vm803 = vcmp.eq.f32.partialorder %v802, 8.507059e+37
  %v804 = vand.u32 %v738, 2147483648
  %v805 = vor.u32 1.1754944e-38, %v804
  %v806 = vsel %vm803, %v805, %v801
  %v807 = vrcp.pop %v741
  %v808 = vmul.f32 %v741, %v807
  %v809 = vsub.f32 1.0, %v808
  %v810 = vmul.f32 %v807, %v809
  %v811 = vadd.f32 %v807, %v810
  %vm812 = vweird.f32 %v741
  %vm813 = vweird.f32 %v807
  %vm814 = vmor %vm812, %vm813
  %v815 = vsel %vm814, %v807, %v811
  %v816 = vand.u32 2147483647, %v741
  %vm817 = vcmp.eq.f32.partialorder %v816, 8.507059e+37
  %v818 = vand.u32 %v741, 2147483648
  %v819 = vor.u32 1.1754944e-38, %v818
  %v820 = vsel %vm817, %v819, %v815
  %v821 = vrcp.pop %v744
  %v822 = vmul.f32 %v744, %v821
  %v823 = vsub.f32 1.0, %v822
  %v824 = vmul.f32 %v821, %v823
  %v825 = vadd.f32 %v821, %v824
  %vm826 = vweird.f32 %v744
  %vm827 = vweird.f32 %v821
  %vm828 = vmor %vm826, %vm827
  %v829 = vsel %vm828, %v821, %v825
  %v830 = vand.u32 2147483647, %v744
  %vm831 = vcmp.eq.f32.partialorder %v830, 8.507059e+37
  %v832 = vand.u32 %v744, 2147483648
  %v833 = vor.u32 1.1754944e-38, %v832
  %v834 = vsel %vm831, %v833, %v829
  %v835 = vrcp.pop %v747
  %v836 = vmul.f32 %v747, %v835
  %v837 = vsub.f32 1.0, %v836
  %v838 = vmul.f32 %v835, %v837
  %v839 = vadd.f32 %v835, %v838
  %vm840 = vweird.f32 %v747
  %vm841 = vweird.f32 %v835
  %vm842 = vmor %vm840, %vm841
  %v843 = vsel %vm842, %v835, %v839
  %v844 = vand.u32 2147483647, %v747
  %vm845 = vcmp.eq.f32.partialorder %v844, 8.507059e+37
  %v846 = vand.u32 %v747, 2147483648
  %v847 = vor.u32 1.1754944e-38, %v846
  %v848 = vsel %vm845, %v847, %v843
  %v849 = vrcp.pop %v750
  %v850 = vmul.f32 %v750, %v849
  %v851 = vsub.f32 1.0, %v850
  %v852 = vmul.f32 %v849, %v851
  %v853 = vadd.f32 %v849, %v852
  %vm854 = vweird.f32 %v750
  %vm855 = vweird.f32 %v849
  %vm856 = vmor %vm854, %vm855
  %v857 = vsel %vm856, %v849, %v853
  %v858 = vand.u32 2147483647, %v750
  %vm859 = vcmp.eq.f32.partialorder %v858, 8.507059e+37
  %v860 = vand.u32 %v750, 2147483648
  %v861 = vor.u32 1.1754944e-38, %v860
  %v862 = vsel %vm859, %v861, %v857
  %v863 = vmul.f32 %v712, %v764
  %v864 = vmul.f32 %v714, %v778
  %v865 = vmul.f32 %v716, %v792
  %v866 = vmul.f32 %v718, %v806
  %v867 = vmul.f32 %v720, %v820
  %v868 = vmul.f32 %v722, %v834
  %v869 = vmul.f32 %v724, %v848
  %v870 = vmul.f32 %v726, %v862
  %871 = vrot.lane.b32.xlu0 %v116, 96
  %v872 = vpop.permute.xlu0 %871
  %873 = vrot.lane.b32.xlu0 %v119, 96
  %v874 = vpop.permute.xlu0 %873
  %875 = vrot.lane.b32.xlu0 %v122, 96
  %v876 = vpop.permute.xlu0 %875
  %877 = vrot.lane.b32.xlu0 %v125, 96
  %v878 = vpop.permute.xlu0 %877
  %879 = vrot.lane.b32.xlu0 %v128, 96
  %v880 = vpop.permute.xlu0 %879
  %881 = vrot.lane.b32.xlu0 %v131, 96
  %v882 = vpop.permute.xlu0 %881
  %883 = vrot.lane.b32.xlu0 %v134, 96
  %v884 = vpop.permute.xlu0 %883
  %885 = vrot.lane.b32.xlu0 %v137, 96
  %v886 = vpop.permute.xlu0 %885
  %v896 = vsel %vm139, %v863, 0
  %v899 = vsel %vm139, %v864, 0
  %v902 = vsel %vm139, %v865, 0
  %v905 = vsel %vm139, %v866, 0
  %v908 = vsel %vm139, %v867, 0
  %v911 = vsel %vm139, %v868, 0
  %v914 = vsel %vm139, %v869, 0
  %v917 = vsel %vm139, %v870, 0
  %919 = vmatpush.msra.mxu0 0.0
  %920 = vmatpush.msra.mxu0 0.0
  %921 = vmatpush.msra.mxu0 0.0
  %922 = vmatpush.msra.mxu0 0.0
  %923 = vmatpush.msra.mxu0 0.0
  %924 = vmatpush.msra.mxu0 0.0
  %925 = vmatpush.msra.mxu0 0.0
  %926 = vmatpush.msra.mxu0 0.0
  %927 = vmatpush.msra.mxu0 %v886
  %928 = vmatpush.msra.mxu0 %v884
  %929 = vmatpush.msra.mxu0 %v882
  %930 = vmatpush.msra.mxu0 %v880
  %931 = vmatpush.msra.mxu0 %v878
  %932 = vmatpush.msra.mxu0 %v876
  %933 = vmatpush.msra.mxu0 %v874
  %934 = vmatpush.msra.mxu0 %v872
  %935 = vmatmul.f32.gmra.mxu0 %v896
  %v936 = vpop.f32.mrf.mxu0
  %v937 = vadd.f32 0.0, %v936
  %938 = vmatmul.f32.gmra.mxu0 %v899
  %v939 = vpop.f32.mrf.mxu0
  %v940 = vadd.f32 0.0, %v939
  %941 = vmatmul.f32.gmra.mxu0 %v902
  %v942 = vpop.f32.mrf.mxu0
  %v943 = vadd.f32 0.0, %v942
  %944 = vmatmul.f32.gmra.mxu0 %v905
  %v945 = vpop.f32.mrf.mxu0
  %v946 = vadd.f32 0.0, %v945
  %947 = vmatmul.f32.gmra.mxu0 %v908
  %v948 = vpop.f32.mrf.mxu0
  %v949 = vadd.f32 0.0, %v948
  %950 = vmatmul.f32.gmra.mxu0 %v911
  %v951 = vpop.f32.mrf.mxu0
  %v952 = vadd.f32 0.0, %v951
  %953 = vmatmul.f32.gmra.mxu0 %v914
  %v954 = vpop.f32.mrf.mxu0
  %v955 = vadd.f32 0.0, %v954
  %956 = vmatmul.f32.gmra.mxu0 %v917
  %v957 = vpop.f32.mrf.mxu0
  %v958 = vadd.f32 0.0, %v957
  %959 = vdwg.mxu0
  %vm960 = vcmp.gt.f32.partialorder %v937, 0.0
  %vm961 = vcmp.gt.f32.partialorder %v940, 0.0
  %vm962 = vcmp.gt.f32.partialorder %v943, 0.0
  %vm963 = vcmp.gt.f32.partialorder %v946, 0.0
  %vm964 = vcmp.gt.f32.partialorder %v949, 0.0
  %vm965 = vcmp.gt.f32.partialorder %v952, 0.0
  %vm966 = vcmp.gt.f32.partialorder %v955, 0.0
  %vm967 = vcmp.gt.f32.partialorder %v958, 0.0
  %v968 = vmul.f32 %v937, 1.442695
  %v969 = vpow.pop %v968
  %v970 = vmul.f32 %v940, 1.442695
  %v971 = vpow.pop %v970
  %v972 = vmul.f32 %v943, 1.442695
  %v973 = vpow.pop %v972
  %v974 = vmul.f32 %v946, 1.442695
  %v975 = vpow.pop %v974
  %v976 = vmul.f32 %v949, 1.442695
  %v977 = vpow.pop %v976
  %v978 = vmul.f32 %v952, 1.442695
  %v979 = vpow.pop %v978
  %v980 = vmul.f32 %v955, 1.442695
  %v981 = vpow.pop %v980
  %v982 = vmul.f32 %v958, 1.442695
  %v983 = vpow.pop %v982
  %v984 = vsub.f32 %v969, 1.0
  %v985 = vsub.f32 %v971, 1.0
  %v986 = vsub.f32 %v973, 1.0
  %v987 = vsub.f32 %v975, 1.0
  %v988 = vsub.f32 %v977, 1.0
  %v989 = vsub.f32 %v979, 1.0
  %v990 = vsub.f32 %v981, 1.0
  %v991 = vsub.f32 %v983, 1.0
  %v992 = vsel %vm960, %v937, %v984
  %v993 = vsel %vm961, %v940, %v985
  %v994 = vsel %vm962, %v943, %v986
  %v995 = vsel %vm963, %v946, %v987
  %v996 = vsel %vm964, %v949, %v988
  %v997 = vsel %vm965, %v952, %v989
  %v998 = vsel %vm966, %v955, %v990
  %v999 = vsel %vm967, %v958, %v991
  %1008 = vrot.lane.b32.xlu0 %v992, 32
  %v1009 = vpop.permute.xlu0 %1008
  %1010 = vrot.lane.b32.xlu0 %v993, 32
  %v1011 = vpop.permute.xlu0 %1010
  %1012 = vrot.lane.b32.xlu0 %v994, 32
  %v1013 = vpop.permute.xlu0 %1012
  %1014 = vrot.lane.b32.xlu0 %v995, 32
  %v1015 = vpop.permute.xlu0 %1014
  %1016 = vrot.lane.b32.xlu0 %v996, 32
  %v1017 = vpop.permute.xlu0 %1016
  %1018 = vrot.lane.b32.xlu0 %v997, 32
  %v1019 = vpop.permute.xlu0 %1018
  %1020 = vrot.lane.b32.xlu0 %v998, 32
  %v1021 = vpop.permute.xlu0 %1020
  %1022 = vrot.lane.b32.xlu0 %v999, 32
  %v1023 = vpop.permute.xlu0 %1022
  %vm1032 = vcmask 261120
  %v1033 = vsel %vm1032, %v598, %v1009
  %v1034 = vsel %vm1032, %v599, %v1011
  %v1035 = vsel %vm1032, %v600, %v1013
  %v1036 = vsel %vm1032, %v601, %v1015
  %v1037 = vsel %vm1032, %v602, %v1017
  %v1038 = vsel %vm1032, %v603, %v1019
  %v1039 = vsel %vm1032, %v604, %v1021
  %v1040 = vsel %vm1032, %v605, %v1023
  %v1041 = vld [vmem:[%s5] sm:$0xff]
  %v1042 = vld [vmem:[%s5 + $0x8] sm:$0xff]
  %v1043 = vld [vmem:[%s5 + $0x10] sm:$0xff]
  %v1044 = vld [vmem:[%s5 + $0x18] sm:$0xff]
  %v1045 = vld [vmem:[%s5 + $0x20] sm:$0xff]
  %v1046 = vld [vmem:[%s5 + $0x28] sm:$0xff]
  %v1047 = vld [vmem:[%s5 + $0x30] sm:$0xff]
  %v1048 = vld [vmem:[%s5 + $0x38] sm:$0xff]
  %v1049 = vld [vmem:[%s6] sm:$0xff]
  %v1050 = vld [vmem:[%s6 + $0x8] sm:$0xff]
  %v1051 = vld [vmem:[%s6 + $0x10] sm:$0xff]
  %v1052 = vld [vmem:[%s6 + $0x18] sm:$0xff]
  %v1053 = vld [vmem:[%s6 + $0x20] sm:$0xff]
  %v1054 = vld [vmem:[%s6 + $0x28] sm:$0xff]
  %v1055 = vld [vmem:[%s6 + $0x30] sm:$0xff]
  %v1056 = vld [vmem:[%s6 + $0x38] sm:$0xff]
  %v1057 = vld [vmem:[%s7] sm:$0x3]
  %v1059 = vsel %vm139, %v1033, 0
  %v1062 = vsel %vm139, %v1034, 0
  %v1065 = vsel %vm139, %v1035, 0
  %v1068 = vsel %vm139, %v1036, 0
  %v1071 = vsel %vm139, %v1037, 0
  %v1074 = vsel %vm139, %v1038, 0
  %v1077 = vsel %vm139, %v1039, 0
  %v1080 = vsel %vm139, %v1040, 0
  %1082 = vmatpush.msra.mxu0 0.0
  %1083 = vmatpush.msra.mxu0 0.0
  %1084 = vmatpush.msra.mxu0 0.0
  %1085 = vmatpush.msra.mxu0 0.0
  %1086 = vmatpush.msra.mxu0 0.0
  %1087 = vmatpush.msra.mxu0 0.0
  %1088 = vmatpush.msra.mxu0 0.0
  %1089 = vmatpush.msra.mxu0 0.0
  %1090 = vmatpush.msra.mxu0 %v1048
  %1091 = vmatpush.msra.mxu0 %v1047
  %1092 = vmatpush.msra.mxu0 %v1046
  %1093 = vmatpush.msra.mxu0 %v1045
  %1094 = vmatpush.msra.mxu0 %v1044
  %1095 = vmatpush.msra.mxu0 %v1043
  %1096 = vmatpush.msra.mxu0 %v1042
  %1097 = vmatpush.msra.mxu0 %v1041
  %1098 = vmatmul.f32.gmra.mxu0 %v1059
  %v1099 = vpop.f32.mrf.mxu0
  %v1100 = vadd.f32 0.0, %v1099
  %1101 = vmatmul.f32.gmra.mxu0 %v1062
  %v1102 = vpop.f32.mrf.mxu0
  %v1103 = vadd.f32 0.0, %v1102
  %1104 = vmatmul.f32.gmra.mxu0 %v1065
  %v1105 = vpop.f32.mrf.mxu0
  %v1106 = vadd.f32 0.0, %v1105
  %1107 = vmatmul.f32.gmra.mxu0 %v1068
  %v1108 = vpop.f32.mrf.mxu0
  %v1109 = vadd.f32 0.0, %v1108
  %1110 = vmatmul.f32.gmra.mxu0 %v1071
  %v1111 = vpop.f32.mrf.mxu0
  %v1112 = vadd.f32 0.0, %v1111
  %1113 = vmatmul.f32.gmra.mxu0 %v1074
  %v1114 = vpop.f32.mrf.mxu0
  %v1115 = vadd.f32 0.0, %v1114
  %1116 = vmatmul.f32.gmra.mxu0 %v1077
  %v1117 = vpop.f32.mrf.mxu0
  %v1118 = vadd.f32 0.0, %v1117
  %1119 = vmatmul.f32.gmra.mxu0 %v1080
  %v1120 = vpop.f32.mrf.mxu0
  %v1121 = vadd.f32 0.0, %v1120
  %1122 = vdwg.mxu0
  %v1124 = vsel %vm139, %v1100, 0
  %v1127 = vsel %vm139, %v1103, 0
  %v1130 = vsel %vm139, %v1106, 0
  %v1133 = vsel %vm139, %v1109, 0
  %v1136 = vsel %vm139, %v1112, 0
  %v1139 = vsel %vm139, %v1115, 0
  %v1142 = vsel %vm139, %v1118, 0
  %v1145 = vsel %vm139, %v1121, 0
  %1147 = vmatpush.msra.mxu0 0.0
  %1148 = vmatpush.msra.mxu0 0.0
  %1149 = vmatpush.msra.mxu0 0.0
  %1150 = vmatpush.msra.mxu0 0.0
  %1151 = vmatpush.msra.mxu0 0.0
  %1152 = vmatpush.msra.mxu0 0.0
  %1153 = vmatpush.msra.mxu0 0.0
  %1154 = vmatpush.msra.mxu0 0.0
  %1155 = vmatpush.msra.mxu0 %v1056
  %1156 = vmatpush.msra.mxu0 %v1055
  %1157 = vmatpush.msra.mxu0 %v1054
  %1158 = vmatpush.msra.mxu0 %v1053
  %1159 = vmatpush.msra.mxu0 %v1052
  %1160 = vmatpush.msra.mxu0 %v1051
  %1161 = vmatpush.msra.mxu0 %v1050
  %1162 = vmatpush.msra.mxu0 %v1049
  %1163 = vmatmul.f32.gmra.mxu0 %v1124
  %v1164 = vpop.f32.mrf.mxu0
  %v1165 = vadd.f32 0.0, %v1164
  %1166 = vmatmul.f32.gmra.mxu0 %v1127
  %v1167 = vpop.f32.mrf.mxu0
  %v1168 = vadd.f32 0.0, %v1167
  %1169 = vmatmul.f32.gmra.mxu0 %v1130
  %v1170 = vpop.f32.mrf.mxu0
  %v1171 = vadd.f32 0.0, %v1170
  %1172 = vmatmul.f32.gmra.mxu0 %v1133
  %v1173 = vpop.f32.mrf.mxu0
  %v1174 = vadd.f32 0.0, %v1173
  %1175 = vmatmul.f32.gmra.mxu0 %v1136
  %v1176 = vpop.f32.mrf.mxu0
  %v1177 = vadd.f32 0.0, %v1176
  %1178 = vmatmul.f32.gmra.mxu0 %v1139
  %v1179 = vpop.f32.mrf.mxu0
  %v1180 = vadd.f32 0.0, %v1179
  %1181 = vmatmul.f32.gmra.mxu0 %v1142
  %v1182 = vpop.f32.mrf.mxu0
  %v1183 = vadd.f32 0.0, %v1182
  %1184 = vmatmul.f32.gmra.mxu0 %v1145
  %v1185 = vpop.f32.mrf.mxu0
  %v1186 = vadd.f32 0.0, %v1185
  %1187 = vdwg.mxu0
  %v1189 = vsel %vm139, %v1057, 0
  %1191 = vmatpush.xpose.msra.mxu0 0.0
  %1192 = vmatpush.xpose.msra.mxu0 0.0
  %1193 = vmatpush.xpose.msra.mxu0 0.0
  %1194 = vmatpush.xpose.msra.mxu0 0.0
  %1195 = vmatpush.xpose.msra.mxu0 0.0
  %1196 = vmatpush.xpose.msra.mxu0 0.0
  %1197 = vmatpush.xpose.msra.mxu0 0.0
  %1198 = vmatpush.xpose.msra.mxu0 0.0
  %1199 = vmatpush.xpose.msra.mxu0 %v1145
  %1200 = vmatpush.xpose.msra.mxu0 %v1142
  %1201 = vmatpush.xpose.msra.mxu0 %v1139
  %1202 = vmatpush.xpose.msra.mxu0 %v1136
  %1203 = vmatpush.xpose.msra.mxu0 %v1133
  %1204 = vmatpush.xpose.msra.mxu0 %v1130
  %1205 = vmatpush.xpose.msra.mxu0 %v1127
  %1206 = vmatpush.xpose.msra.mxu0 %v1124
  %1207 = vmatmul.f32.gmra.mxu0 %v1189
  %v1208 = vpop.f32.mrf.mxu0
  %v1209 = vadd.f32 0.0, %v1208
  %1210 = vdwg.mxu0
  %1212 = vset.pattern.permute.xlu0 0
  %1213 = vperm.xlu0 %1212, %v1165
  %v1214 = vpop.permute.xlu0 %1213
  %1217 = vset.pattern.permute.xlu0 0
  %1218 = vperm.xlu0 %1217, %v1168
  %v1219 = vpop.permute.xlu0 %1218
  %1222 = vset.pattern.permute.xlu0 0
  %1223 = vperm.xlu0 %1222, %v1171
  %v1224 = vpop.permute.xlu0 %1223
  %1227 = vset.pattern.permute.xlu0 0
  %1228 = vperm.xlu0 %1227, %v1174
  %v1229 = vpop.permute.xlu0 %1228
  %1232 = vset.pattern.permute.xlu0 0
  %1233 = vperm.xlu0 %1232, %v1177
  %v1234 = vpop.permute.xlu0 %1233
  %1237 = vset.pattern.permute.xlu0 0
  %1238 = vperm.xlu0 %1237, %v1180
  %v1239 = vpop.permute.xlu0 %1238
  %1242 = vset.pattern.permute.xlu0 0
  %1243 = vperm.xlu0 %1242, %v1183
  %v1244 = vpop.permute.xlu0 %1243
  %1247 = vset.pattern.permute.xlu0 0
  %1248 = vperm.xlu0 %1247, %v1186
  %v1249 = vpop.permute.xlu0 %1248
  %v1251 = vperm.slane %v1209, 0
  %v1252 = vadd.f32 %v1214, %v1251
  %v1253 = vadd.f32 %v1219, %v1251
  %v1254 = vadd.f32 %v1224, %v1251
  %v1255 = vadd.f32 %v1229, %v1251
  %v1256 = vadd.f32 %v1234, %v1251
  %v1257 = vadd.f32 %v1239, %v1251
  %v1258 = vadd.f32 %v1244, %v1251
  %v1259 = vadd.f32 %v1249, %v1251
  %vm1260 = vcmp.gt.f32.partialorder %v1252, 0.0
  %vm1261 = vcmp.gt.f32.partialorder %v1253, 0.0
  %vm1262 = vcmp.gt.f32.partialorder %v1254, 0.0
  %vm1263 = vcmp.gt.f32.partialorder %v1255, 0.0
  %vm1264 = vcmp.gt.f32.partialorder %v1256, 0.0
  %vm1265 = vcmp.gt.f32.partialorder %v1257, 0.0
  %vm1266 = vcmp.gt.f32.partialorder %v1258, 0.0
  %vm1267 = vcmp.gt.f32.partialorder %v1259, 0.0
  %v1268 = vmul.f32 %v1252, 0.2
  %v1269 = vmul.f32 %v1253, 0.2
  %v1270 = vmul.f32 %v1254, 0.2
  %v1271 = vmul.f32 %v1255, 0.2
  %v1272 = vmul.f32 %v1256, 0.2
  %v1273 = vmul.f32 %v1257, 0.2
  %v1274 = vmul.f32 %v1258, 0.2
  %v1275 = vmul.f32 %v1259, 0.2
  %v1276 = vsel %vm1260, %v1252, %v1268
  %v1277 = vsel %vm1261, %v1253, %v1269
  %v1278 = vsel %vm1262, %v1254, %v1270
  %v1279 = vsel %vm1263, %v1255, %v1271
  %v1280 = vsel %vm1264, %v1256, %v1272
  %v1281 = vsel %vm1265, %v1257, %v1273
  %v1282 = vsel %vm1266, %v1258, %v1274
  %v1283 = vsel %vm1267, %v1259, %v1275
  %v1284 = vadd.f32 %v1276, %v46
  %v1285 = vadd.f32 %v1277, %v47
  %v1286 = vadd.f32 %v1278, %v48
  %v1287 = vadd.f32 %v1279, %v49
  %v1288 = vadd.f32 %v1280, %v50
  %v1289 = vadd.f32 %v1281, %v51
  %v1290 = vadd.f32 %v1282, %v52
  %v1291 = vadd.f32 %v1283, %v53
  %v1292 = vsel %vm139, %v1284, -inf
  %1293 = vmax.xlane.f32.xlu0 %v1292
  %v1294 = vpop.xlane.xlu0 %1293
  %v1295 = vsel %vm139, %v1285, -inf
  %1296 = vmax.xlane.f32.xlu0 %v1295
  %v1297 = vpop.xlane.xlu0 %1296
  %v1298 = vsel %vm139, %v1286, -inf
  %1299 = vmax.xlane.f32.xlu0 %v1298
  %v1300 = vpop.xlane.xlu0 %1299
  %v1301 = vsel %vm139, %v1287, -inf
  %1302 = vmax.xlane.f32.xlu0 %v1301
  %v1303 = vpop.xlane.xlu0 %1302
  %v1304 = vsel %vm139, %v1288, -inf
  %1305 = vmax.xlane.f32.xlu0 %v1304
  %v1306 = vpop.xlane.xlu0 %1305
  %v1307 = vsel %vm139, %v1289, -inf
  %1308 = vmax.xlane.f32.xlu0 %v1307
  %v1309 = vpop.xlane.xlu0 %1308
  %v1310 = vsel %vm139, %v1290, -inf
  %1311 = vmax.xlane.f32.xlu0 %v1310
  %v1312 = vpop.xlane.xlu0 %1311
  %v1313 = vsel %vm139, %v1291, -inf
  %1314 = vmax.xlane.f32.xlu0 %v1313
  %v1315 = vpop.xlane.xlu0 %1314
  %v1316 = vsub.f32 %v1284, %v1294
  %v1317 = vsub.f32 %v1285, %v1297
  %v1318 = vsub.f32 %v1286, %v1300
  %v1319 = vsub.f32 %v1287, %v1303
  %v1320 = vsub.f32 %v1288, %v1306
  %v1321 = vsub.f32 %v1289, %v1309
  %v1322 = vsub.f32 %v1290, %v1312
  %v1323 = vsub.f32 %v1291, %v1315
  %v1324 = vmul.f32 %v1316, 1.442695
  %v1325 = vpow.pop %v1324
  %v1326 = vmul.f32 %v1317, 1.442695
  %v1327 = vpow.pop %v1326
  %v1328 = vmul.f32 %v1318, 1.442695
  %v1329 = vpow.pop %v1328
  %v1330 = vmul.f32 %v1319, 1.442695
  %v1331 = vpow.pop %v1330
  %v1332 = vmul.f32 %v1320, 1.442695
  %v1333 = vpow.pop %v1332
  %v1334 = vmul.f32 %v1321, 1.442695
  %v1335 = vpow.pop %v1334
  %v1336 = vmul.f32 %v1322, 1.442695
  %v1337 = vpow.pop %v1336
  %v1338 = vmul.f32 %v1323, 1.442695
  %v1339 = vpow.pop %v1338
  %v1340 = vsel %vm139, %v1325, 0.0
  %1341 = vadd.xlane.f32.xlu0 %v1340
  %v1342 = vpop.xlane.xlu0 %1341
  %v1343 = vsel %vm139, %v1327, 0.0
  %1344 = vadd.xlane.f32.xlu0 %v1343
  %v1345 = vpop.xlane.xlu0 %1344
  %v1346 = vsel %vm139, %v1329, 0.0
  %1347 = vadd.xlane.f32.xlu0 %v1346
  %v1348 = vpop.xlane.xlu0 %1347
  %v1349 = vsel %vm139, %v1331, 0.0
  %1350 = vadd.xlane.f32.xlu0 %v1349
  %v1351 = vpop.xlane.xlu0 %1350
  %v1352 = vsel %vm139, %v1333, 0.0
  %1353 = vadd.xlane.f32.xlu0 %v1352
  %v1354 = vpop.xlane.xlu0 %1353
  %v1355 = vsel %vm139, %v1335, 0.0
  %1356 = vadd.xlane.f32.xlu0 %v1355
  %v1357 = vpop.xlane.xlu0 %1356
  %v1358 = vsel %vm139, %v1337, 0.0
  %1359 = vadd.xlane.f32.xlu0 %v1358
  %v1360 = vpop.xlane.xlu0 %1359
  %v1361 = vsel %vm139, %v1339, 0.0
  %1362 = vadd.xlane.f32.xlu0 %v1361
  %v1363 = vpop.xlane.xlu0 %1362
  %v1364 = vrcp.pop %v1342
  %v1365 = vmul.f32 %v1342, %v1364
  %v1366 = vsub.f32 1.0, %v1365
  %v1367 = vmul.f32 %v1364, %v1366
  %v1368 = vadd.f32 %v1364, %v1367
  %vm1369 = vweird.f32 %v1342
  %vm1370 = vweird.f32 %v1364
  %vm1371 = vmor %vm1369, %vm1370
  %v1372 = vsel %vm1371, %v1364, %v1368
  %v1373 = vand.u32 2147483647, %v1342
  %vm1374 = vcmp.eq.f32.partialorder %v1373, 8.507059e+37
  %v1375 = vand.u32 %v1342, 2147483648
  %v1376 = vor.u32 1.1754944e-38, %v1375
  %v1377 = vsel %vm1374, %v1376, %v1372
  %v1378 = vrcp.pop %v1345
  %v1379 = vmul.f32 %v1345, %v1378
  %v1380 = vsub.f32 1.0, %v1379
  %v1381 = vmul.f32 %v1378, %v1380
  %v1382 = vadd.f32 %v1378, %v1381
  %vm1383 = vweird.f32 %v1345
  %vm1384 = vweird.f32 %v1378
  %vm1385 = vmor %vm1383, %vm1384
  %v1386 = vsel %vm1385, %v1378, %v1382
  %v1387 = vand.u32 2147483647, %v1345
  %vm1388 = vcmp.eq.f32.partialorder %v1387, 8.507059e+37
  %v1389 = vand.u32 %v1345, 2147483648
  %v1390 = vor.u32 1.1754944e-38, %v1389
  %v1391 = vsel %vm1388, %v1390, %v1386
  %v1392 = vrcp.pop %v1348
  %v1393 = vmul.f32 %v1348, %v1392
  %v1394 = vsub.f32 1.0, %v1393
  %v1395 = vmul.f32 %v1392, %v1394
  %v1396 = vadd.f32 %v1392, %v1395
  %vm1397 = vweird.f32 %v1348
  %vm1398 = vweird.f32 %v1392
  %vm1399 = vmor %vm1397, %vm1398
  %v1400 = vsel %vm1399, %v1392, %v1396
  %v1401 = vand.u32 2147483647, %v1348
  %vm1402 = vcmp.eq.f32.partialorder %v1401, 8.507059e+37
  %v1403 = vand.u32 %v1348, 2147483648
  %v1404 = vor.u32 1.1754944e-38, %v1403
  %v1405 = vsel %vm1402, %v1404, %v1400
  %v1406 = vrcp.pop %v1351
  %v1407 = vmul.f32 %v1351, %v1406
  %v1408 = vsub.f32 1.0, %v1407
  %v1409 = vmul.f32 %v1406, %v1408
  %v1410 = vadd.f32 %v1406, %v1409
  %vm1411 = vweird.f32 %v1351
  %vm1412 = vweird.f32 %v1406
  %vm1413 = vmor %vm1411, %vm1412
  %v1414 = vsel %vm1413, %v1406, %v1410
  %v1415 = vand.u32 2147483647, %v1351
  %vm1416 = vcmp.eq.f32.partialorder %v1415, 8.507059e+37
  %v1417 = vand.u32 %v1351, 2147483648
  %v1418 = vor.u32 1.1754944e-38, %v1417
  %v1419 = vsel %vm1416, %v1418, %v1414
  %v1420 = vrcp.pop %v1354
  %v1421 = vmul.f32 %v1354, %v1420
  %v1422 = vsub.f32 1.0, %v1421
  %v1423 = vmul.f32 %v1420, %v1422
  %v1424 = vadd.f32 %v1420, %v1423
  %vm1425 = vweird.f32 %v1354
  %vm1426 = vweird.f32 %v1420
  %vm1427 = vmor %vm1425, %vm1426
  %v1428 = vsel %vm1427, %v1420, %v1424
  %v1429 = vand.u32 2147483647, %v1354
  %vm1430 = vcmp.eq.f32.partialorder %v1429, 8.507059e+37
  %v1431 = vand.u32 %v1354, 2147483648
  %v1432 = vor.u32 1.1754944e-38, %v1431
  %v1433 = vsel %vm1430, %v1432, %v1428
  %v1434 = vrcp.pop %v1357
  %v1435 = vmul.f32 %v1357, %v1434
  %v1436 = vsub.f32 1.0, %v1435
  %v1437 = vmul.f32 %v1434, %v1436
  %v1438 = vadd.f32 %v1434, %v1437
  %vm1439 = vweird.f32 %v1357
  %vm1440 = vweird.f32 %v1434
  %vm1441 = vmor %vm1439, %vm1440
  %v1442 = vsel %vm1441, %v1434, %v1438
  %v1443 = vand.u32 2147483647, %v1357
  %vm1444 = vcmp.eq.f32.partialorder %v1443, 8.507059e+37
  %v1445 = vand.u32 %v1357, 2147483648
  %v1446 = vor.u32 1.1754944e-38, %v1445
  %v1447 = vsel %vm1444, %v1446, %v1442
  %v1448 = vrcp.pop %v1360
  %v1449 = vmul.f32 %v1360, %v1448
  %v1450 = vsub.f32 1.0, %v1449
  %v1451 = vmul.f32 %v1448, %v1450
  %v1452 = vadd.f32 %v1448, %v1451
  %vm1453 = vweird.f32 %v1360
  %vm1454 = vweird.f32 %v1448
  %vm1455 = vmor %vm1453, %vm1454
  %v1456 = vsel %vm1455, %v1448, %v1452
  %v1457 = vand.u32 2147483647, %v1360
  %vm1458 = vcmp.eq.f32.partialorder %v1457, 8.507059e+37
  %v1459 = vand.u32 %v1360, 2147483648
  %v1460 = vor.u32 1.1754944e-38, %v1459
  %v1461 = vsel %vm1458, %v1460, %v1456
  %v1462 = vrcp.pop %v1363
  %v1463 = vmul.f32 %v1363, %v1462
  %v1464 = vsub.f32 1.0, %v1463
  %v1465 = vmul.f32 %v1462, %v1464
  %v1466 = vadd.f32 %v1462, %v1465
  %vm1467 = vweird.f32 %v1363
  %vm1468 = vweird.f32 %v1462
  %vm1469 = vmor %vm1467, %vm1468
  %v1470 = vsel %vm1469, %v1462, %v1466
  %v1471 = vand.u32 2147483647, %v1363
  %vm1472 = vcmp.eq.f32.partialorder %v1471, 8.507059e+37
  %v1473 = vand.u32 %v1363, 2147483648
  %v1474 = vor.u32 1.1754944e-38, %v1473
  %v1475 = vsel %vm1472, %v1474, %v1470
  %v1476 = vmul.f32 %v1325, %v1377
  %v1477 = vmul.f32 %v1327, %v1391
  %v1478 = vmul.f32 %v1329, %v1405
  %v1479 = vmul.f32 %v1331, %v1419
  %v1480 = vmul.f32 %v1333, %v1433
  %v1481 = vmul.f32 %v1335, %v1447
  %v1482 = vmul.f32 %v1337, %v1461
  %v1483 = vmul.f32 %v1339, %v1475
  %v1485 = vsel %vm139, %v1476, 0
  %v1488 = vsel %vm139, %v1477, 0
  %v1491 = vsel %vm139, %v1478, 0
  %v1494 = vsel %vm139, %v1479, 0
  %v1497 = vsel %vm139, %v1480, 0
  %v1500 = vsel %vm139, %v1481, 0
  %v1503 = vsel %vm139, %v1482, 0
  %v1506 = vsel %vm139, %v1483, 0
  %1508 = vmatpush.msra.mxu0 0.0
  %1509 = vmatpush.msra.mxu0 0.0
  %1510 = vmatpush.msra.mxu0 0.0
  %1511 = vmatpush.msra.mxu0 0.0
  %1512 = vmatpush.msra.mxu0 0.0
  %1513 = vmatpush.msra.mxu0 0.0
  %1514 = vmatpush.msra.mxu0 0.0
  %1515 = vmatpush.msra.mxu0 0.0
  %1516 = vmatpush.msra.mxu0 %v1121
  %1517 = vmatpush.msra.mxu0 %v1118
  %1518 = vmatpush.msra.mxu0 %v1115
  %1519 = vmatpush.msra.mxu0 %v1112
  %1520 = vmatpush.msra.mxu0 %v1109
  %1521 = vmatpush.msra.mxu0 %v1106
  %1522 = vmatpush.msra.mxu0 %v1103
  %1523 = vmatpush.msra.mxu0 %v1100
  %1524 = vmatmul.f32.gmra.mxu0 %v1485
  %v1525 = vpop.f32.mrf.mxu0
  %v1526 = vadd.f32 0.0, %v1525
  %1527 = vmatmul.f32.gmra.mxu0 %v1488
  %v1528 = vpop.f32.mrf.mxu0
  %v1529 = vadd.f32 0.0, %v1528
  %1530 = vmatmul.f32.gmra.mxu0 %v1491
  %v1531 = vpop.f32.mrf.mxu0
  %v1532 = vadd.f32 0.0, %v1531
  %1533 = vmatmul.f32.gmra.mxu0 %v1494
  %v1534 = vpop.f32.mrf.mxu0
  %v1535 = vadd.f32 0.0, %v1534
  %1536 = vmatmul.f32.gmra.mxu0 %v1497
  %v1537 = vpop.f32.mrf.mxu0
  %v1538 = vadd.f32 0.0, %v1537
  %1539 = vmatmul.f32.gmra.mxu0 %v1500
  %v1540 = vpop.f32.mrf.mxu0
  %v1541 = vadd.f32 0.0, %v1540
  %1542 = vmatmul.f32.gmra.mxu0 %v1503
  %v1543 = vpop.f32.mrf.mxu0
  %v1544 = vadd.f32 0.0, %v1543
  %1545 = vmatmul.f32.gmra.mxu0 %v1506
  %v1546 = vpop.f32.mrf.mxu0
  %v1547 = vadd.f32 0.0, %v1546
  %1548 = vdwg.mxu0
  %vm1549 = vcmp.gt.f32.partialorder %v1526, 0.0
  %vm1550 = vcmp.gt.f32.partialorder %v1529, 0.0
  %vm1551 = vcmp.gt.f32.partialorder %v1532, 0.0
  %vm1552 = vcmp.gt.f32.partialorder %v1535, 0.0
  %vm1553 = vcmp.gt.f32.partialorder %v1538, 0.0
  %vm1554 = vcmp.gt.f32.partialorder %v1541, 0.0
  %vm1555 = vcmp.gt.f32.partialorder %v1544, 0.0
  %vm1556 = vcmp.gt.f32.partialorder %v1547, 0.0
  %v1557 = vmul.f32 %v1526, 1.442695
  %v1558 = vpow.pop %v1557
  %v1559 = vmul.f32 %v1529, 1.442695
  %v1560 = vpow.pop %v1559
  %v1561 = vmul.f32 %v1532, 1.442695
  %v1562 = vpow.pop %v1561
  %v1563 = vmul.f32 %v1535, 1.442695
  %v1564 = vpow.pop %v1563
  %v1565 = vmul.f32 %v1538, 1.442695
  %v1566 = vpow.pop %v1565
  %v1567 = vmul.f32 %v1541, 1.442695
  %v1568 = vpow.pop %v1567
  %v1569 = vmul.f32 %v1544, 1.442695
  %v1570 = vpow.pop %v1569
  %v1571 = vmul.f32 %v1547, 1.442695
  %v1572 = vpow.pop %v1571
  %v1573 = vsub.f32 %v1558, 1.0
  %v1574 = vsub.f32 %v1560, 1.0
  %v1575 = vsub.f32 %v1562, 1.0
  %v1576 = vsub.f32 %v1564, 1.0
  %v1577 = vsub.f32 %v1566, 1.0
  %v1578 = vsub.f32 %v1568, 1.0
  %v1579 = vsub.f32 %v1570, 1.0
  %v1580 = vsub.f32 %v1572, 1.0
  %v1581 = vsel %vm1549, %v1526, %v1573
  %v1582 = vsel %vm1550, %v1529, %v1574
  %v1583 = vsel %vm1551, %v1532, %v1575
  %v1584 = vsel %vm1552, %v1535, %v1576
  %v1585 = vsel %vm1553, %v1538, %v1577
  %v1586 = vsel %vm1554, %v1541, %v1578
  %v1587 = vsel %vm1555, %v1544, %v1579
  %v1588 = vsel %vm1556, %v1547, %v1580
  %1589 = vset.pattern.permute.xlu0 1
  %1590 = vperm.xlu0 %1589, %v1165
  %v1591 = vpop.permute.xlu0 %1590
  %1593 = vset.pattern.permute.xlu0 1
  %1594 = vperm.xlu0 %1593, %v1168
  %v1595 = vpop.permute.xlu0 %1594
  %1597 = vset.pattern.permute.xlu0 1
  %1598 = vperm.xlu0 %1597, %v1171
  %v1599 = vpop.permute.xlu0 %1598
  %1601 = vset.pattern.permute.xlu0 1
  %1602 = vperm.xlu0 %1601, %v1174
  %v1603 = vpop.permute.xlu0 %1602
  %1605 = vset.pattern.permute.xlu0 1
  %1606 = vperm.xlu0 %1605, %v1177
  %v1607 = vpop.permute.xlu0 %1606
  %1609 = vset.pattern.permute.xlu0 1
  %1610 = vperm.xlu0 %1609, %v1180
  %v1611 = vpop.permute.xlu0 %1610
  %1613 = vset.pattern.permute.xlu0 1
  %1614 = vperm.xlu0 %1613, %v1183
  %v1615 = vpop.permute.xlu0 %1614
  %1617 = vset.pattern.permute.xlu0 1
  %1618 = vperm.xlu0 %1617, %v1186
  %v1619 = vpop.permute.xlu0 %1618
  %v1621 = vperm.slane %v1209, 1
  %v1622 = vadd.f32 %v1591, %v1621
  %v1623 = vadd.f32 %v1595, %v1621
  %v1624 = vadd.f32 %v1599, %v1621
  %v1625 = vadd.f32 %v1603, %v1621
  %v1626 = vadd.f32 %v1607, %v1621
  %v1627 = vadd.f32 %v1611, %v1621
  %v1628 = vadd.f32 %v1615, %v1621
  %v1629 = vadd.f32 %v1619, %v1621
  %vm1630 = vcmp.gt.f32.partialorder %v1622, 0.0
  %vm1631 = vcmp.gt.f32.partialorder %v1623, 0.0
  %vm1632 = vcmp.gt.f32.partialorder %v1624, 0.0
  %vm1633 = vcmp.gt.f32.partialorder %v1625, 0.0
  %vm1634 = vcmp.gt.f32.partialorder %v1626, 0.0
  %vm1635 = vcmp.gt.f32.partialorder %v1627, 0.0
  %vm1636 = vcmp.gt.f32.partialorder %v1628, 0.0
  %vm1637 = vcmp.gt.f32.partialorder %v1629, 0.0
  %v1638 = vmul.f32 %v1622, 0.2
  %v1639 = vmul.f32 %v1623, 0.2
  %v1640 = vmul.f32 %v1624, 0.2
  %v1641 = vmul.f32 %v1625, 0.2
  %v1642 = vmul.f32 %v1626, 0.2
  %v1643 = vmul.f32 %v1627, 0.2
  %v1644 = vmul.f32 %v1628, 0.2
  %v1645 = vmul.f32 %v1629, 0.2
  %v1646 = vsel %vm1630, %v1622, %v1638
  %v1647 = vsel %vm1631, %v1623, %v1639
  %v1648 = vsel %vm1632, %v1624, %v1640
  %v1649 = vsel %vm1633, %v1625, %v1641
  %v1650 = vsel %vm1634, %v1626, %v1642
  %v1651 = vsel %vm1635, %v1627, %v1643
  %v1652 = vsel %vm1636, %v1628, %v1644
  %v1653 = vsel %vm1637, %v1629, %v1645
  %v1654 = vadd.f32 %v1646, %v46
  %v1655 = vadd.f32 %v1647, %v47
  %v1656 = vadd.f32 %v1648, %v48
  %v1657 = vadd.f32 %v1649, %v49
  %v1658 = vadd.f32 %v1650, %v50
  %v1659 = vadd.f32 %v1651, %v51
  %v1660 = vadd.f32 %v1652, %v52
  %v1661 = vadd.f32 %v1653, %v53
  %v1662 = vsel %vm139, %v1654, -inf
  %1663 = vmax.xlane.f32.xlu0 %v1662
  %v1664 = vpop.xlane.xlu0 %1663
  %v1665 = vsel %vm139, %v1655, -inf
  %1666 = vmax.xlane.f32.xlu0 %v1665
  %v1667 = vpop.xlane.xlu0 %1666
  %v1668 = vsel %vm139, %v1656, -inf
  %1669 = vmax.xlane.f32.xlu0 %v1668
  %v1670 = vpop.xlane.xlu0 %1669
  %v1671 = vsel %vm139, %v1657, -inf
  %1672 = vmax.xlane.f32.xlu0 %v1671
  %v1673 = vpop.xlane.xlu0 %1672
  %v1674 = vsel %vm139, %v1658, -inf
  %1675 = vmax.xlane.f32.xlu0 %v1674
  %v1676 = vpop.xlane.xlu0 %1675
  %v1677 = vsel %vm139, %v1659, -inf
  %1678 = vmax.xlane.f32.xlu0 %v1677
  %v1679 = vpop.xlane.xlu0 %1678
  %v1680 = vsel %vm139, %v1660, -inf
  %1681 = vmax.xlane.f32.xlu0 %v1680
  %v1682 = vpop.xlane.xlu0 %1681
  %v1683 = vsel %vm139, %v1661, -inf
  %1684 = vmax.xlane.f32.xlu0 %v1683
  %v1685 = vpop.xlane.xlu0 %1684
  %v1686 = vsub.f32 %v1654, %v1664
  %v1687 = vsub.f32 %v1655, %v1667
  %v1688 = vsub.f32 %v1656, %v1670
  %v1689 = vsub.f32 %v1657, %v1673
  %v1690 = vsub.f32 %v1658, %v1676
  %v1691 = vsub.f32 %v1659, %v1679
  %v1692 = vsub.f32 %v1660, %v1682
  %v1693 = vsub.f32 %v1661, %v1685
  %v1694 = vmul.f32 %v1686, 1.442695
  %v1695 = vpow.pop %v1694
  %v1696 = vmul.f32 %v1687, 1.442695
  %v1697 = vpow.pop %v1696
  %v1698 = vmul.f32 %v1688, 1.442695
  %v1699 = vpow.pop %v1698
  %v1700 = vmul.f32 %v1689, 1.442695
  %v1701 = vpow.pop %v1700
  %v1702 = vmul.f32 %v1690, 1.442695
  %v1703 = vpow.pop %v1702
  %v1704 = vmul.f32 %v1691, 1.442695
  %v1705 = vpow.pop %v1704
  %v1706 = vmul.f32 %v1692, 1.442695
  %v1707 = vpow.pop %v1706
  %v1708 = vmul.f32 %v1693, 1.442695
  %v1709 = vpow.pop %v1708
  %v1710 = vsel %vm139, %v1695, 0.0
  %1711 = vadd.xlane.f32.xlu0 %v1710
  %v1712 = vpop.xlane.xlu0 %1711
  %v1713 = vsel %vm139, %v1697, 0.0
  %1714 = vadd.xlane.f32.xlu0 %v1713
  %v1715 = vpop.xlane.xlu0 %1714
  %v1716 = vsel %vm139, %v1699, 0.0
  %1717 = vadd.xlane.f32.xlu0 %v1716
  %v1718 = vpop.xlane.xlu0 %1717
  %v1719 = vsel %vm139, %v1701, 0.0
  %1720 = vadd.xlane.f32.xlu0 %v1719
  %v1721 = vpop.xlane.xlu0 %1720
  %v1722 = vsel %vm139, %v1703, 0.0
  %1723 = vadd.xlane.f32.xlu0 %v1722
  %v1724 = vpop.xlane.xlu0 %1723
  %v1725 = vsel %vm139, %v1705, 0.0
  %1726 = vadd.xlane.f32.xlu0 %v1725
  %v1727 = vpop.xlane.xlu0 %1726
  %v1728 = vsel %vm139, %v1707, 0.0
  %1729 = vadd.xlane.f32.xlu0 %v1728
  %v1730 = vpop.xlane.xlu0 %1729
  %v1731 = vsel %vm139, %v1709, 0.0
  %1732 = vadd.xlane.f32.xlu0 %v1731
  %v1733 = vpop.xlane.xlu0 %1732
  %v1734 = vrcp.pop %v1712
  %v1735 = vmul.f32 %v1712, %v1734
  %v1736 = vsub.f32 1.0, %v1735
  %v1737 = vmul.f32 %v1734, %v1736
  %v1738 = vadd.f32 %v1734, %v1737
  %vm1739 = vweird.f32 %v1712
  %vm1740 = vweird.f32 %v1734
  %vm1741 = vmor %vm1739, %vm1740
  %v1742 = vsel %vm1741, %v1734, %v1738
  %v1743 = vand.u32 2147483647, %v1712
  %vm1744 = vcmp.eq.f32.partialorder %v1743, 8.507059e+37
  %v1745 = vand.u32 %v1712, 2147483648
  %v1746 = vor.u32 1.1754944e-38, %v1745
  %v1747 = vsel %vm1744, %v1746, %v1742
  %v1748 = vrcp.pop %v1715
  %v1749 = vmul.f32 %v1715, %v1748
  %v1750 = vsub.f32 1.0, %v1749
  %v1751 = vmul.f32 %v1748, %v1750
  %v1752 = vadd.f32 %v1748, %v1751
  %vm1753 = vweird.f32 %v1715
  %vm1754 = vweird.f32 %v1748
  %vm1755 = vmor %vm1753, %vm1754
  %v1756 = vsel %vm1755, %v1748, %v1752
  %v1757 = vand.u32 2147483647, %v1715
  %vm1758 = vcmp.eq.f32.partialorder %v1757, 8.507059e+37
  %v1759 = vand.u32 %v1715, 2147483648
  %v1760 = vor.u32 1.1754944e-38, %v1759
  %v1761 = vsel %vm1758, %v1760, %v1756
  %v1762 = vrcp.pop %v1718
  %v1763 = vmul.f32 %v1718, %v1762
  %v1764 = vsub.f32 1.0, %v1763
  %v1765 = vmul.f32 %v1762, %v1764
  %v1766 = vadd.f32 %v1762, %v1765
  %vm1767 = vweird.f32 %v1718
  %vm1768 = vweird.f32 %v1762
  %vm1769 = vmor %vm1767, %vm1768
  %v1770 = vsel %vm1769, %v1762, %v1766
  %v1771 = vand.u32 2147483647, %v1718
  %vm1772 = vcmp.eq.f32.partialorder %v1771, 8.507059e+37
  %v1773 = vand.u32 %v1718, 2147483648
  %v1774 = vor.u32 1.1754944e-38, %v1773
  %v1775 = vsel %vm1772, %v1774, %v1770
  %v1776 = vrcp.pop %v1721
  %v1777 = vmul.f32 %v1721, %v1776
  %v1778 = vsub.f32 1.0, %v1777
  %v1779 = vmul.f32 %v1776, %v1778
  %v1780 = vadd.f32 %v1776, %v1779
  %vm1781 = vweird.f32 %v1721
  %vm1782 = vweird.f32 %v1776
  %vm1783 = vmor %vm1781, %vm1782
  %v1784 = vsel %vm1783, %v1776, %v1780
  %v1785 = vand.u32 2147483647, %v1721
  %vm1786 = vcmp.eq.f32.partialorder %v1785, 8.507059e+37
  %v1787 = vand.u32 %v1721, 2147483648
  %v1788 = vor.u32 1.1754944e-38, %v1787
  %v1789 = vsel %vm1786, %v1788, %v1784
  %v1790 = vrcp.pop %v1724
  %v1791 = vmul.f32 %v1724, %v1790
  %v1792 = vsub.f32 1.0, %v1791
  %v1793 = vmul.f32 %v1790, %v1792
  %v1794 = vadd.f32 %v1790, %v1793
  %vm1795 = vweird.f32 %v1724
  %vm1796 = vweird.f32 %v1790
  %vm1797 = vmor %vm1795, %vm1796
  %v1798 = vsel %vm1797, %v1790, %v1794
  %v1799 = vand.u32 2147483647, %v1724
  %vm1800 = vcmp.eq.f32.partialorder %v1799, 8.507059e+37
  %v1801 = vand.u32 %v1724, 2147483648
  %v1802 = vor.u32 1.1754944e-38, %v1801
  %v1803 = vsel %vm1800, %v1802, %v1798
  %v1804 = vrcp.pop %v1727
  %v1805 = vmul.f32 %v1727, %v1804
  %v1806 = vsub.f32 1.0, %v1805
  %v1807 = vmul.f32 %v1804, %v1806
  %v1808 = vadd.f32 %v1804, %v1807
  %vm1809 = vweird.f32 %v1727
  %vm1810 = vweird.f32 %v1804
  %vm1811 = vmor %vm1809, %vm1810
  %v1812 = vsel %vm1811, %v1804, %v1808
  %v1813 = vand.u32 2147483647, %v1727
  %vm1814 = vcmp.eq.f32.partialorder %v1813, 8.507059e+37
  %v1815 = vand.u32 %v1727, 2147483648
  %v1816 = vor.u32 1.1754944e-38, %v1815
  %v1817 = vsel %vm1814, %v1816, %v1812
  %v1818 = vrcp.pop %v1730
  %v1819 = vmul.f32 %v1730, %v1818
  %v1820 = vsub.f32 1.0, %v1819
  %v1821 = vmul.f32 %v1818, %v1820
  %v1822 = vadd.f32 %v1818, %v1821
  %vm1823 = vweird.f32 %v1730
  %vm1824 = vweird.f32 %v1818
  %vm1825 = vmor %vm1823, %vm1824
  %v1826 = vsel %vm1825, %v1818, %v1822
  %v1827 = vand.u32 2147483647, %v1730
  %vm1828 = vcmp.eq.f32.partialorder %v1827, 8.507059e+37
  %v1829 = vand.u32 %v1730, 2147483648
  %v1830 = vor.u32 1.1754944e-38, %v1829
  %v1831 = vsel %vm1828, %v1830, %v1826
  %v1832 = vrcp.pop %v1733
  %v1833 = vmul.f32 %v1733, %v1832
  %v1834 = vsub.f32 1.0, %v1833
  %v1835 = vmul.f32 %v1832, %v1834
  %v1836 = vadd.f32 %v1832, %v1835
  %vm1837 = vweird.f32 %v1733
  %vm1838 = vweird.f32 %v1832
  %vm1839 = vmor %vm1837, %vm1838
  %v1840 = vsel %vm1839, %v1832, %v1836
  %v1841 = vand.u32 2147483647, %v1733
  %vm1842 = vcmp.eq.f32.partialorder %v1841, 8.507059e+37
  %v1843 = vand.u32 %v1733, 2147483648
  %v1844 = vor.u32 1.1754944e-38, %v1843
  %v1845 = vsel %vm1842, %v1844, %v1840
  %v1846 = vmul.f32 %v1695, %v1747
  %v1847 = vmul.f32 %v1697, %v1761
  %v1848 = vmul.f32 %v1699, %v1775
  %v1849 = vmul.f32 %v1701, %v1789
  %v1850 = vmul.f32 %v1703, %v1803
  %v1851 = vmul.f32 %v1705, %v1817
  %v1852 = vmul.f32 %v1707, %v1831
  %v1853 = vmul.f32 %v1709, %v1845
  %1854 = vrot.lane.b32.xlu0 %v1100, 96
  %v1855 = vpop.permute.xlu0 %1854
  %1856 = vrot.lane.b32.xlu0 %v1103, 96
  %v1857 = vpop.permute.xlu0 %1856
  %1858 = vrot.lane.b32.xlu0 %v1106, 96
  %v1859 = vpop.permute.xlu0 %1858
  %1860 = vrot.lane.b32.xlu0 %v1109, 96
  %v1861 = vpop.permute.xlu0 %1860
  %1862 = vrot.lane.b32.xlu0 %v1112, 96
  %v1863 = vpop.permute.xlu0 %1862
  %1864 = vrot.lane.b32.xlu0 %v1115, 96
  %v1865 = vpop.permute.xlu0 %1864
  %1866 = vrot.lane.b32.xlu0 %v1118, 96
  %v1867 = vpop.permute.xlu0 %1866
  %1868 = vrot.lane.b32.xlu0 %v1121, 96
  %v1869 = vpop.permute.xlu0 %1868
  %v1879 = vsel %vm139, %v1846, 0
  %v1882 = vsel %vm139, %v1847, 0
  %v1885 = vsel %vm139, %v1848, 0
  %v1888 = vsel %vm139, %v1849, 0
  %v1891 = vsel %vm139, %v1850, 0
  %v1894 = vsel %vm139, %v1851, 0
  %v1897 = vsel %vm139, %v1852, 0
  %v1900 = vsel %vm139, %v1853, 0
  %1902 = vmatpush.msra.mxu0 0.0
  %1903 = vmatpush.msra.mxu0 0.0
  %1904 = vmatpush.msra.mxu0 0.0
  %1905 = vmatpush.msra.mxu0 0.0
  %1906 = vmatpush.msra.mxu0 0.0
  %1907 = vmatpush.msra.mxu0 0.0
  %1908 = vmatpush.msra.mxu0 0.0
  %1909 = vmatpush.msra.mxu0 0.0
  %1910 = vmatpush.msra.mxu0 %v1869
  %1911 = vmatpush.msra.mxu0 %v1867
  %1912 = vmatpush.msra.mxu0 %v1865
  %1913 = vmatpush.msra.mxu0 %v1863
  %1914 = vmatpush.msra.mxu0 %v1861
  %1915 = vmatpush.msra.mxu0 %v1859
  %1916 = vmatpush.msra.mxu0 %v1857
  %1917 = vmatpush.msra.mxu0 %v1855
  %1918 = vmatmul.f32.gmra.mxu0 %v1879
  %v1919 = vpop.f32.mrf.mxu0
  %v1920 = vadd.f32 0.0, %v1919
  %1921 = vmatmul.f32.gmra.mxu0 %v1882
  %v1922 = vpop.f32.mrf.mxu0
  %v1923 = vadd.f32 0.0, %v1922
  %1924 = vmatmul.f32.gmra.mxu0 %v1885
  %v1925 = vpop.f32.mrf.mxu0
  %v1926 = vadd.f32 0.0, %v1925
  %1927 = vmatmul.f32.gmra.mxu0 %v1888
  %v1928 = vpop.f32.mrf.mxu0
  %v1929 = vadd.f32 0.0, %v1928
  %1930 = vmatmul.f32.gmra.mxu0 %v1891
  %v1931 = vpop.f32.mrf.mxu0
  %v1932 = vadd.f32 0.0, %v1931
  %1933 = vmatmul.f32.gmra.mxu0 %v1894
  %v1934 = vpop.f32.mrf.mxu0
  %v1935 = vadd.f32 0.0, %v1934
  %1936 = vmatmul.f32.gmra.mxu0 %v1897
  %v1937 = vpop.f32.mrf.mxu0
  %v1938 = vadd.f32 0.0, %v1937
  %1939 = vmatmul.f32.gmra.mxu0 %v1900
  %v1940 = vpop.f32.mrf.mxu0
  %v1941 = vadd.f32 0.0, %v1940
  %1942 = vdwg.mxu0
  %vm1943 = vcmp.gt.f32.partialorder %v1920, 0.0
  %vm1944 = vcmp.gt.f32.partialorder %v1923, 0.0
  %vm1945 = vcmp.gt.f32.partialorder %v1926, 0.0
  %vm1946 = vcmp.gt.f32.partialorder %v1929, 0.0
  %vm1947 = vcmp.gt.f32.partialorder %v1932, 0.0
  %vm1948 = vcmp.gt.f32.partialorder %v1935, 0.0
  %vm1949 = vcmp.gt.f32.partialorder %v1938, 0.0
  %vm1950 = vcmp.gt.f32.partialorder %v1941, 0.0
  %v1951 = vmul.f32 %v1920, 1.442695
  %v1952 = vpow.pop %v1951
  %v1953 = vmul.f32 %v1923, 1.442695
  %v1954 = vpow.pop %v1953
  %v1955 = vmul.f32 %v1926, 1.442695
  %v1956 = vpow.pop %v1955
  %v1957 = vmul.f32 %v1929, 1.442695
  %v1958 = vpow.pop %v1957
  %v1959 = vmul.f32 %v1932, 1.442695
  %v1960 = vpow.pop %v1959
  %v1961 = vmul.f32 %v1935, 1.442695
  %v1962 = vpow.pop %v1961
  %v1963 = vmul.f32 %v1938, 1.442695
  %v1964 = vpow.pop %v1963
  %v1965 = vmul.f32 %v1941, 1.442695
  %v1966 = vpow.pop %v1965
  %v1967 = vsub.f32 %v1952, 1.0
  %v1968 = vsub.f32 %v1954, 1.0
  %v1969 = vsub.f32 %v1956, 1.0
  %v1970 = vsub.f32 %v1958, 1.0
  %v1971 = vsub.f32 %v1960, 1.0
  %v1972 = vsub.f32 %v1962, 1.0
  %v1973 = vsub.f32 %v1964, 1.0
  %v1974 = vsub.f32 %v1966, 1.0
  %v1975 = vsel %vm1943, %v1920, %v1967
  %v1976 = vsel %vm1944, %v1923, %v1968
  %v1977 = vsel %vm1945, %v1926, %v1969
  %v1978 = vsel %vm1946, %v1929, %v1970
  %v1979 = vsel %vm1947, %v1932, %v1971
  %v1980 = vsel %vm1948, %v1935, %v1972
  %v1981 = vsel %vm1949, %v1938, %v1973
  %v1982 = vsel %vm1950, %v1941, %v1974
  %1991 = vrot.lane.b32.xlu0 %v1975, 32
  %v1992 = vpop.permute.xlu0 %1991
  %1993 = vrot.lane.b32.xlu0 %v1976, 32
  %v1994 = vpop.permute.xlu0 %1993
  %1995 = vrot.lane.b32.xlu0 %v1977, 32
  %v1996 = vpop.permute.xlu0 %1995
  %1997 = vrot.lane.b32.xlu0 %v1978, 32
  %v1998 = vpop.permute.xlu0 %1997
  %1999 = vrot.lane.b32.xlu0 %v1979, 32
  %v2000 = vpop.permute.xlu0 %1999
  %2001 = vrot.lane.b32.xlu0 %v1980, 32
  %v2002 = vpop.permute.xlu0 %2001
  %2003 = vrot.lane.b32.xlu0 %v1981, 32
  %v2004 = vpop.permute.xlu0 %2003
  %2005 = vrot.lane.b32.xlu0 %v1982, 32
  %v2006 = vpop.permute.xlu0 %2005
  %v2015 = vsel %vm1032, %v1581, %v1992
  %v2016 = vsel %vm1032, %v1582, %v1994
  %v2017 = vsel %vm1032, %v1583, %v1996
  %v2018 = vsel %vm1032, %v1584, %v1998
  %v2019 = vsel %vm1032, %v1585, %v2000
  %v2020 = vsel %vm1032, %v1586, %v2002
  %v2021 = vsel %vm1032, %v1587, %v2004
  %v2022 = vsel %vm1032, %v1588, %v2006
  %v2023 = vld [vmem:[%s8] sm:$0xff]
  %v2024 = vld [vmem:[%s8 + $0x8] sm:$0xff]
  %v2025 = vld [vmem:[%s8 + $0x10] sm:$0xff]
  %v2026 = vld [vmem:[%s8 + $0x18] sm:$0xff]
  %v2027 = vld [vmem:[%s8 + $0x20] sm:$0xff]
  %v2028 = vld [vmem:[%s8 + $0x28] sm:$0xff]
  %v2029 = vld [vmem:[%s8 + $0x30] sm:$0xff]
  %v2030 = vld [vmem:[%s8 + $0x38] sm:$0xff]
  %v2031 = vld [vmem:[%s9] sm:$0xff]
  %v2032 = vld [vmem:[%s10] sm:$0x1]
  %v2034 = vsel %vm139, %v2015, 0
  %v2037 = vsel %vm139, %v2016, 0
  %v2040 = vsel %vm139, %v2017, 0
  %v2043 = vsel %vm139, %v2018, 0
  %v2046 = vsel %vm139, %v2019, 0
  %v2049 = vsel %vm139, %v2020, 0
  %v2052 = vsel %vm139, %v2021, 0
  %v2055 = vsel %vm139, %v2022, 0
  %2057 = vmatpush.msra.mxu0 0.0
  %2058 = vmatpush.msra.mxu0 0.0
  %2059 = vmatpush.msra.mxu0 0.0
  %2060 = vmatpush.msra.mxu0 0.0
  %2061 = vmatpush.msra.mxu0 0.0
  %2062 = vmatpush.msra.mxu0 0.0
  %2063 = vmatpush.msra.mxu0 0.0
  %2064 = vmatpush.msra.mxu0 0.0
  %2065 = vmatpush.msra.mxu0 %v2030
  %2066 = vmatpush.msra.mxu0 %v2029
  %2067 = vmatpush.msra.mxu0 %v2028
  %2068 = vmatpush.msra.mxu0 %v2027
  %2069 = vmatpush.msra.mxu0 %v2026
  %2070 = vmatpush.msra.mxu0 %v2025
  %2071 = vmatpush.msra.mxu0 %v2024
  %2072 = vmatpush.msra.mxu0 %v2023
  %2073 = vmatmul.f32.gmra.mxu0 %v2034
  %v2074 = vpop.f32.mrf.mxu0
  %v2075 = vadd.f32 0.0, %v2074
  %2076 = vmatmul.f32.gmra.mxu0 %v2037
  %v2077 = vpop.f32.mrf.mxu0
  %v2078 = vadd.f32 0.0, %v2077
  %2079 = vmatmul.f32.gmra.mxu0 %v2040
  %v2080 = vpop.f32.mrf.mxu0
  %v2081 = vadd.f32 0.0, %v2080
  %2082 = vmatmul.f32.gmra.mxu0 %v2043
  %v2083 = vpop.f32.mrf.mxu0
  %v2084 = vadd.f32 0.0, %v2083
  %2085 = vmatmul.f32.gmra.mxu0 %v2046
  %v2086 = vpop.f32.mrf.mxu0
  %v2087 = vadd.f32 0.0, %v2086
  %2088 = vmatmul.f32.gmra.mxu0 %v2049
  %v2089 = vpop.f32.mrf.mxu0
  %v2090 = vadd.f32 0.0, %v2089
  %2091 = vmatmul.f32.gmra.mxu0 %v2052
  %v2092 = vpop.f32.mrf.mxu0
  %v2093 = vadd.f32 0.0, %v2092
  %2094 = vmatmul.f32.gmra.mxu0 %v2055
  %v2095 = vpop.f32.mrf.mxu0
  %v2096 = vadd.f32 0.0, %v2095
  %2097 = vdwg.mxu0
  %vm2098 = vcmask 64512
  %v2100 = vsel %vm2098, %v2075, 0
  %v2103 = vsel %vm2098, %v2078, 0
  %v2106 = vsel %vm2098, %v2081, 0
  %v2109 = vsel %vm2098, %v2084, 0
  %v2112 = vsel %vm2098, %v2087, 0
  %v2115 = vsel %vm2098, %v2090, 0
  %v2118 = vsel %vm2098, %v2093, 0
  %v2121 = vsel %vm2098, %v2096, 0
  %2123 = vmatpush.msra.mxu0 0.0
  %2124 = vmatpush.msra.mxu0 0.0
  %2125 = vmatpush.msra.mxu0 0.0
  %2126 = vmatpush.msra.mxu0 0.0
  %2127 = vmatpush.msra.mxu0 0.0
  %2128 = vmatpush.msra.mxu0 0.0
  %2129 = vmatpush.msra.mxu0 0.0
  %2130 = vmatpush.msra.mxu0 0.0
  %2131 = vmatpush.msra.mxu0 0.0
  %2132 = vmatpush.msra.mxu0 0.0
  %2133 = vmatpush.msra.mxu0 0.0
  %2134 = vmatpush.msra.mxu0 0.0
  %2135 = vmatpush.msra.mxu0 0.0
  %2136 = vmatpush.msra.mxu0 0.0
  %2137 = vmatpush.msra.mxu0 0.0
  %2138 = vmatpush.msra.mxu0 %v2031
  %2139 = vmatmul.f32.gmra.mxu0 %v2100
  %v2140 = vpop.f32.mrf.mxu0
  %v2141 = vadd.f32 0.0, %v2140
  %2142 = vmatmul.f32.gmra.mxu0 %v2103
  %v2143 = vpop.f32.mrf.mxu0
  %v2144 = vadd.f32 0.0, %v2143
  %2145 = vmatmul.f32.gmra.mxu0 %v2106
  %v2146 = vpop.f32.mrf.mxu0
  %v2147 = vadd.f32 0.0, %v2146
  %2148 = vmatmul.f32.gmra.mxu0 %v2109
  %v2149 = vpop.f32.mrf.mxu0
  %v2150 = vadd.f32 0.0, %v2149
  %2151 = vmatmul.f32.gmra.mxu0 %v2112
  %v2152 = vpop.f32.mrf.mxu0
  %v2153 = vadd.f32 0.0, %v2152
  %2154 = vmatmul.f32.gmra.mxu0 %v2115
  %v2155 = vpop.f32.mrf.mxu0
  %v2156 = vadd.f32 0.0, %v2155
  %2157 = vmatmul.f32.gmra.mxu0 %v2118
  %v2158 = vpop.f32.mrf.mxu0
  %v2159 = vadd.f32 0.0, %v2158
  %2160 = vmatmul.f32.gmra.mxu0 %v2121
  %v2161 = vpop.f32.mrf.mxu0
  %v2162 = vadd.f32 0.0, %v2161
  %2163 = vdwg.mxu0
  %v2165 = vsel %vm2098, %v2032, 0
  %2167 = vmatpush.xpose.msra.mxu0 0.0
  %2168 = vmatpush.xpose.msra.mxu0 0.0
  %2169 = vmatpush.xpose.msra.mxu0 0.0
  %2170 = vmatpush.xpose.msra.mxu0 0.0
  %2171 = vmatpush.xpose.msra.mxu0 0.0
  %2172 = vmatpush.xpose.msra.mxu0 0.0
  %2173 = vmatpush.xpose.msra.mxu0 0.0
  %2174 = vmatpush.xpose.msra.mxu0 0.0
  %2175 = vmatpush.xpose.msra.mxu0 %v2121
  %2176 = vmatpush.xpose.msra.mxu0 %v2118
  %2177 = vmatpush.xpose.msra.mxu0 %v2115
  %2178 = vmatpush.xpose.msra.mxu0 %v2112
  %2179 = vmatpush.xpose.msra.mxu0 %v2109
  %2180 = vmatpush.xpose.msra.mxu0 %v2106
  %2181 = vmatpush.xpose.msra.mxu0 %v2103
  %2182 = vmatpush.xpose.msra.mxu0 %v2100
  %2183 = vmatmul.f32.gmra.mxu0 %v2165
  %v2184 = vpop.f32.mrf.mxu0
  %v2185 = vadd.f32 0.0, %v2184
  %2186 = vdwg.mxu0
  %2188 = vset.pattern.permute.xlu0 0
  %2189 = vperm.xlu0 %2188, %v2141
  %v2190 = vpop.permute.xlu0 %2189
  %2193 = vset.pattern.permute.xlu0 0
  %2194 = vperm.xlu0 %2193, %v2144
  %v2195 = vpop.permute.xlu0 %2194
  %2198 = vset.pattern.permute.xlu0 0
  %2199 = vperm.xlu0 %2198, %v2147
  %v2200 = vpop.permute.xlu0 %2199
  %2203 = vset.pattern.permute.xlu0 0
  %2204 = vperm.xlu0 %2203, %v2150
  %v2205 = vpop.permute.xlu0 %2204
  %2208 = vset.pattern.permute.xlu0 0
  %2209 = vperm.xlu0 %2208, %v2153
  %v2210 = vpop.permute.xlu0 %2209
  %2213 = vset.pattern.permute.xlu0 0
  %2214 = vperm.xlu0 %2213, %v2156
  %v2215 = vpop.permute.xlu0 %2214
  %2218 = vset.pattern.permute.xlu0 0
  %2219 = vperm.xlu0 %2218, %v2159
  %v2220 = vpop.permute.xlu0 %2219
  %2223 = vset.pattern.permute.xlu0 0
  %2224 = vperm.xlu0 %2223, %v2162
  %v2225 = vpop.permute.xlu0 %2224
  %v2227 = vperm.slane %v2185, 0
  %v2228 = vadd.f32 %v2190, %v2227
  %v2229 = vadd.f32 %v2195, %v2227
  %v2230 = vadd.f32 %v2200, %v2227
  %v2231 = vadd.f32 %v2205, %v2227
  %v2232 = vadd.f32 %v2210, %v2227
  %v2233 = vadd.f32 %v2215, %v2227
  %v2234 = vadd.f32 %v2220, %v2227
  %v2235 = vadd.f32 %v2225, %v2227
  %vm2236 = vcmp.gt.f32.partialorder %v2228, 0.0
  %vm2237 = vcmp.gt.f32.partialorder %v2229, 0.0
  %vm2238 = vcmp.gt.f32.partialorder %v2230, 0.0
  %vm2239 = vcmp.gt.f32.partialorder %v2231, 0.0
  %vm2240 = vcmp.gt.f32.partialorder %v2232, 0.0
  %vm2241 = vcmp.gt.f32.partialorder %v2233, 0.0
  %vm2242 = vcmp.gt.f32.partialorder %v2234, 0.0
  %vm2243 = vcmp.gt.f32.partialorder %v2235, 0.0
  %v2244 = vmul.f32 %v2228, 0.2
  %v2245 = vmul.f32 %v2229, 0.2
  %v2246 = vmul.f32 %v2230, 0.2
  %v2247 = vmul.f32 %v2231, 0.2
  %v2248 = vmul.f32 %v2232, 0.2
  %v2249 = vmul.f32 %v2233, 0.2
  %v2250 = vmul.f32 %v2234, 0.2
  %v2251 = vmul.f32 %v2235, 0.2
  %v2252 = vsel %vm2236, %v2228, %v2244
  %v2253 = vsel %vm2237, %v2229, %v2245
  %v2254 = vsel %vm2238, %v2230, %v2246
  %v2255 = vsel %vm2239, %v2231, %v2247
  %v2256 = vsel %vm2240, %v2232, %v2248
  %v2257 = vsel %vm2241, %v2233, %v2249
  %v2258 = vsel %vm2242, %v2234, %v2250
  %v2259 = vsel %vm2243, %v2235, %v2251
  %v2260 = vadd.f32 %v2252, %v46
  %v2261 = vadd.f32 %v2253, %v47
  %v2262 = vadd.f32 %v2254, %v48
  %v2263 = vadd.f32 %v2255, %v49
  %v2264 = vadd.f32 %v2256, %v50
  %v2265 = vadd.f32 %v2257, %v51
  %v2266 = vadd.f32 %v2258, %v52
  %v2267 = vadd.f32 %v2259, %v53
  %v2268 = vsel %vm139, %v2260, -inf
  %2269 = vmax.xlane.f32.xlu0 %v2268
  %v2270 = vpop.xlane.xlu0 %2269
  %v2271 = vsel %vm139, %v2261, -inf
  %2272 = vmax.xlane.f32.xlu0 %v2271
  %v2273 = vpop.xlane.xlu0 %2272
  %v2274 = vsel %vm139, %v2262, -inf
  %2275 = vmax.xlane.f32.xlu0 %v2274
  %v2276 = vpop.xlane.xlu0 %2275
  %v2277 = vsel %vm139, %v2263, -inf
  %2278 = vmax.xlane.f32.xlu0 %v2277
  %v2279 = vpop.xlane.xlu0 %2278
  %v2280 = vsel %vm139, %v2264, -inf
  %2281 = vmax.xlane.f32.xlu0 %v2280
  %v2282 = vpop.xlane.xlu0 %2281
  %v2283 = vsel %vm139, %v2265, -inf
  %2284 = vmax.xlane.f32.xlu0 %v2283
  %v2285 = vpop.xlane.xlu0 %2284
  %v2286 = vsel %vm139, %v2266, -inf
  %2287 = vmax.xlane.f32.xlu0 %v2286
  %v2288 = vpop.xlane.xlu0 %2287
  %v2289 = vsel %vm139, %v2267, -inf
  %2290 = vmax.xlane.f32.xlu0 %v2289
  %v2291 = vpop.xlane.xlu0 %2290
  %v2292 = vsub.f32 %v2260, %v2270
  %v2293 = vsub.f32 %v2261, %v2273
  %v2294 = vsub.f32 %v2262, %v2276
  %v2295 = vsub.f32 %v2263, %v2279
  %v2296 = vsub.f32 %v2264, %v2282
  %v2297 = vsub.f32 %v2265, %v2285
  %v2298 = vsub.f32 %v2266, %v2288
  %v2299 = vsub.f32 %v2267, %v2291
  %v2300 = vmul.f32 %v2292, 1.442695
  %v2301 = vpow.pop %v2300
  %v2302 = vmul.f32 %v2293, 1.442695
  %v2303 = vpow.pop %v2302
  %v2304 = vmul.f32 %v2294, 1.442695
  %v2305 = vpow.pop %v2304
  %v2306 = vmul.f32 %v2295, 1.442695
  %v2307 = vpow.pop %v2306
  %v2308 = vmul.f32 %v2296, 1.442695
  %v2309 = vpow.pop %v2308
  %v2310 = vmul.f32 %v2297, 1.442695
  %v2311 = vpow.pop %v2310
  %v2312 = vmul.f32 %v2298, 1.442695
  %v2313 = vpow.pop %v2312
  %v2314 = vmul.f32 %v2299, 1.442695
  %v2315 = vpow.pop %v2314
  %v2316 = vsel %vm139, %v2301, 0.0
  %2317 = vadd.xlane.f32.xlu0 %v2316
  %v2318 = vpop.xlane.xlu0 %2317
  %v2319 = vsel %vm139, %v2303, 0.0
  %2320 = vadd.xlane.f32.xlu0 %v2319
  %v2321 = vpop.xlane.xlu0 %2320
  %v2322 = vsel %vm139, %v2305, 0.0
  %2323 = vadd.xlane.f32.xlu0 %v2322
  %v2324 = vpop.xlane.xlu0 %2323
  %v2325 = vsel %vm139, %v2307, 0.0
  %2326 = vadd.xlane.f32.xlu0 %v2325
  %v2327 = vpop.xlane.xlu0 %2326
  %v2328 = vsel %vm139, %v2309, 0.0
  %2329 = vadd.xlane.f32.xlu0 %v2328
  %v2330 = vpop.xlane.xlu0 %2329
  %v2331 = vsel %vm139, %v2311, 0.0
  %2332 = vadd.xlane.f32.xlu0 %v2331
  %v2333 = vpop.xlane.xlu0 %2332
  %v2334 = vsel %vm139, %v2313, 0.0
  %2335 = vadd.xlane.f32.xlu0 %v2334
  %v2336 = vpop.xlane.xlu0 %2335
  %v2337 = vsel %vm139, %v2315, 0.0
  %2338 = vadd.xlane.f32.xlu0 %v2337
  %v2339 = vpop.xlane.xlu0 %2338
  %v2340 = vrcp.pop %v2318
  %v2341 = vmul.f32 %v2318, %v2340
  %v2342 = vsub.f32 1.0, %v2341
  %v2343 = vmul.f32 %v2340, %v2342
  %v2344 = vadd.f32 %v2340, %v2343
  %vm2345 = vweird.f32 %v2318
  %vm2346 = vweird.f32 %v2340
  %vm2347 = vmor %vm2345, %vm2346
  %v2348 = vsel %vm2347, %v2340, %v2344
  %v2349 = vand.u32 2147483647, %v2318
  %vm2350 = vcmp.eq.f32.partialorder %v2349, 8.507059e+37
  %v2351 = vand.u32 %v2318, 2147483648
  %v2352 = vor.u32 1.1754944e-38, %v2351
  %v2353 = vsel %vm2350, %v2352, %v2348
  %v2354 = vrcp.pop %v2321
  %v2355 = vmul.f32 %v2321, %v2354
  %v2356 = vsub.f32 1.0, %v2355
  %v2357 = vmul.f32 %v2354, %v2356
  %v2358 = vadd.f32 %v2354, %v2357
  %vm2359 = vweird.f32 %v2321
  %vm2360 = vweird.f32 %v2354
  %vm2361 = vmor %vm2359, %vm2360
  %v2362 = vsel %vm2361, %v2354, %v2358
  %v2363 = vand.u32 2147483647, %v2321
  %vm2364 = vcmp.eq.f32.partialorder %v2363, 8.507059e+37
  %v2365 = vand.u32 %v2321, 2147483648
  %v2366 = vor.u32 1.1754944e-38, %v2365
  %v2367 = vsel %vm2364, %v2366, %v2362
  %v2368 = vrcp.pop %v2324
  %v2369 = vmul.f32 %v2324, %v2368
  %v2370 = vsub.f32 1.0, %v2369
  %v2371 = vmul.f32 %v2368, %v2370
  %v2372 = vadd.f32 %v2368, %v2371
  %vm2373 = vweird.f32 %v2324
  %vm2374 = vweird.f32 %v2368
  %vm2375 = vmor %vm2373, %vm2374
  %v2376 = vsel %vm2375, %v2368, %v2372
  %v2377 = vand.u32 2147483647, %v2324
  %vm2378 = vcmp.eq.f32.partialorder %v2377, 8.507059e+37
  %v2379 = vand.u32 %v2324, 2147483648
  %v2380 = vor.u32 1.1754944e-38, %v2379
  %v2381 = vsel %vm2378, %v2380, %v2376
  %v2382 = vrcp.pop %v2327
  %v2383 = vmul.f32 %v2327, %v2382
  %v2384 = vsub.f32 1.0, %v2383
  %v2385 = vmul.f32 %v2382, %v2384
  %v2386 = vadd.f32 %v2382, %v2385
  %vm2387 = vweird.f32 %v2327
  %vm2388 = vweird.f32 %v2382
  %vm2389 = vmor %vm2387, %vm2388
  %v2390 = vsel %vm2389, %v2382, %v2386
  %v2391 = vand.u32 2147483647, %v2327
  %vm2392 = vcmp.eq.f32.partialorder %v2391, 8.507059e+37
  %v2393 = vand.u32 %v2327, 2147483648
  %v2394 = vor.u32 1.1754944e-38, %v2393
  %v2395 = vsel %vm2392, %v2394, %v2390
  %v2396 = vrcp.pop %v2330
  %v2397 = vmul.f32 %v2330, %v2396
  %v2398 = vsub.f32 1.0, %v2397
  %v2399 = vmul.f32 %v2396, %v2398
  %v2400 = vadd.f32 %v2396, %v2399
  %vm2401 = vweird.f32 %v2330
  %vm2402 = vweird.f32 %v2396
  %vm2403 = vmor %vm2401, %vm2402
  %v2404 = vsel %vm2403, %v2396, %v2400
  %v2405 = vand.u32 2147483647, %v2330
  %vm2406 = vcmp.eq.f32.partialorder %v2405, 8.507059e+37
  %v2407 = vand.u32 %v2330, 2147483648
  %v2408 = vor.u32 1.1754944e-38, %v2407
  %v2409 = vsel %vm2406, %v2408, %v2404
  %v2410 = vrcp.pop %v2333
  %v2411 = vmul.f32 %v2333, %v2410
  %v2412 = vsub.f32 1.0, %v2411
  %v2413 = vmul.f32 %v2410, %v2412
  %v2414 = vadd.f32 %v2410, %v2413
  %vm2415 = vweird.f32 %v2333
  %vm2416 = vweird.f32 %v2410
  %vm2417 = vmor %vm2415, %vm2416
  %v2418 = vsel %vm2417, %v2410, %v2414
  %v2419 = vand.u32 2147483647, %v2333
  %vm2420 = vcmp.eq.f32.partialorder %v2419, 8.507059e+37
  %v2421 = vand.u32 %v2333, 2147483648
  %v2422 = vor.u32 1.1754944e-38, %v2421
  %v2423 = vsel %vm2420, %v2422, %v2418
  %v2424 = vrcp.pop %v2336
  %v2425 = vmul.f32 %v2336, %v2424
  %v2426 = vsub.f32 1.0, %v2425
  %v2427 = vmul.f32 %v2424, %v2426
  %v2428 = vadd.f32 %v2424, %v2427
  %vm2429 = vweird.f32 %v2336
  %vm2430 = vweird.f32 %v2424
  %vm2431 = vmor %vm2429, %vm2430
  %v2432 = vsel %vm2431, %v2424, %v2428
  %v2433 = vand.u32 2147483647, %v2336
  %vm2434 = vcmp.eq.f32.partialorder %v2433, 8.507059e+37
  %v2435 = vand.u32 %v2336, 2147483648
  %v2436 = vor.u32 1.1754944e-38, %v2435
  %v2437 = vsel %vm2434, %v2436, %v2432
  %v2438 = vrcp.pop %v2339
  %v2439 = vmul.f32 %v2339, %v2438
  %v2440 = vsub.f32 1.0, %v2439
  %v2441 = vmul.f32 %v2438, %v2440
  %v2442 = vadd.f32 %v2438, %v2441
  %vm2443 = vweird.f32 %v2339
  %vm2444 = vweird.f32 %v2438
  %vm2445 = vmor %vm2443, %vm2444
  %v2446 = vsel %vm2445, %v2438, %v2442
  %v2447 = vand.u32 2147483647, %v2339
  %vm2448 = vcmp.eq.f32.partialorder %v2447, 8.507059e+37
  %v2449 = vand.u32 %v2339, 2147483648
  %v2450 = vor.u32 1.1754944e-38, %v2449
  %v2451 = vsel %vm2448, %v2450, %v2446
  %v2452 = vmul.f32 %v2301, %v2353
  %v2453 = vmul.f32 %v2303, %v2367
  %v2454 = vmul.f32 %v2305, %v2381
  %v2455 = vmul.f32 %v2307, %v2395
  %v2456 = vmul.f32 %v2309, %v2409
  %v2457 = vmul.f32 %v2311, %v2423
  %v2458 = vmul.f32 %v2313, %v2437
  %v2459 = vmul.f32 %v2315, %v2451
  %v2461 = vsel %vm139, %v2452, 0
  %v2464 = vsel %vm139, %v2453, 0
  %v2467 = vsel %vm139, %v2454, 0
  %v2470 = vsel %vm139, %v2455, 0
  %v2473 = vsel %vm139, %v2456, 0
  %v2476 = vsel %vm139, %v2457, 0
  %v2479 = vsel %vm139, %v2458, 0
  %v2482 = vsel %vm139, %v2459, 0
  %2484 = vmatpush.msra.mxu0 0.0
  %2485 = vmatpush.msra.mxu0 0.0
  %2486 = vmatpush.msra.mxu0 0.0
  %2487 = vmatpush.msra.mxu0 0.0
  %2488 = vmatpush.msra.mxu0 0.0
  %2489 = vmatpush.msra.mxu0 0.0
  %2490 = vmatpush.msra.mxu0 0.0
  %2491 = vmatpush.msra.mxu0 0.0
  %2492 = vmatpush.msra.mxu0 %v2096
  %2493 = vmatpush.msra.mxu0 %v2093
  %2494 = vmatpush.msra.mxu0 %v2090
  %2495 = vmatpush.msra.mxu0 %v2087
  %2496 = vmatpush.msra.mxu0 %v2084
  %2497 = vmatpush.msra.mxu0 %v2081
  %2498 = vmatpush.msra.mxu0 %v2078
  %2499 = vmatpush.msra.mxu0 %v2075
  %2500 = vmatmul.f32.gmra.mxu0 %v2461
  %v2501 = vpop.f32.mrf.mxu0
  %v2502 = vadd.f32 0.0, %v2501
  %2503 = vmatmul.f32.gmra.mxu0 %v2464
  %v2504 = vpop.f32.mrf.mxu0
  %v2505 = vadd.f32 0.0, %v2504
  %2506 = vmatmul.f32.gmra.mxu0 %v2467
  %v2507 = vpop.f32.mrf.mxu0
  %v2508 = vadd.f32 0.0, %v2507
  %2509 = vmatmul.f32.gmra.mxu0 %v2470
  %v2510 = vpop.f32.mrf.mxu0
  %v2511 = vadd.f32 0.0, %v2510
  %2512 = vmatmul.f32.gmra.mxu0 %v2473
  %v2513 = vpop.f32.mrf.mxu0
  %v2514 = vadd.f32 0.0, %v2513
  %2515 = vmatmul.f32.gmra.mxu0 %v2476
  %v2516 = vpop.f32.mrf.mxu0
  %v2517 = vadd.f32 0.0, %v2516
  %2518 = vmatmul.f32.gmra.mxu0 %v2479
  %v2519 = vpop.f32.mrf.mxu0
  %v2520 = vadd.f32 0.0, %v2519
  %2521 = vmatmul.f32.gmra.mxu0 %v2482
  %v2522 = vpop.f32.mrf.mxu0
  %v2523 = vadd.f32 0.0, %v2522
  %2524 = vdwg.mxu0
  %v2525 = vtanh.pop %v2502
  %v2526 = vtanh.pop %v2505
  %v2527 = vtanh.pop %v2508
  %v2528 = vtanh.pop %v2511
  %v2529 = vtanh.pop %v2514
  %v2530 = vtanh.pop %v2517
  %v2531 = vtanh.pop %v2520
  %v2532 = vtanh.pop %v2523
  %2533 = vst.msk [vmem:[%s11] sm:$0xff] %vm2098, %v2525
  %2534 = vst.msk [vmem:[%s11 + $0x8] sm:$0xff] %vm2098, %v2526
  %2535 = vst.msk [vmem:[%s11 + $0x10] sm:$0xff] %vm2098, %v2527
  %2536 = vst.msk [vmem:[%s11 + $0x18] sm:$0xff] %vm2098, %v2528
  %2537 = vst.msk [vmem:[%s11 + $0x20] sm:$0xff] %vm2098, %v2529
  %2538 = vst.msk [vmem:[%s11 + $0x28] sm:$0xff] %vm2098, %v2530
  %2539 = vst.msk [vmem:[%s11 + $0x30] sm:$0xff] %vm2098, %v2531
  %2540 = vst.msk [vmem:[%s11 + $0x38] sm:$0xff] %vm2098, %v2532
  // Predicated region
  $region46: #{tpu_custom_call.1} parent=0 // pred_check
    _
  $region47: #{tpu_custom_call.1} parent=0 // pred_check_branch
    %2542 = sbr.rel (0) target = $region49
  $region48: #{tpu_custom_call.1} parent=0 // pred_region
    _
  $region49: #{tpu_custom_call.1} parent=0 // pred_fallthru
    _
  // Predicated region
  $region50: #{tpu_custom_call.1} parent=0 // pred_check
    _
  $region51: #{tpu_custom_call.1} parent=0 // pred_check_branch
    %2544 = sbr.rel (0) target = $region53
  $region52: #{tpu_custom_call.1} parent=0 // pred_region
    _
  $region53: #{tpu_custom_call.1} parent=0 // pred_fallthru
    _

</llo_original>
